<compile_context>
chip_gen: v7x
topology: tpu7x:2x2x1
jax: 0.10.0
libtpu: 0.0.40
codegen_flags: <defaults>
</compile_context>

<pallas_src>
import functools

import jax
import jax.numpy as jnp
from jax.experimental import pallas as pl
from jax.experimental.pallas import tpu as pltpu


def _round_up(n, m):
    return -(-n // m) * m


def _video_classifier_kernel(x_ref, w1_ref, w2_ref, wc_ref, bias_ref, o_ref):
    """One batch tile, batch dense on the lane axis.

    x_ref    : (T, F, TILE)   x dtype (f32 or bf16)
    w1_ref   : (DA, F)        f32   torch Linear(f, da).weight
    w2_ref   : (R, DA)        f32   torch Linear(da, r).weight
    wc_ref   : (R, F)         f32   folded fc2 @ fc1 (reshaped)
    bias_ref : (BIAS_ROWS, 1) f32   packed [b1 | b2 | bc] on 8-aligned rows
    o_ref    : (1, TILE)      f32   lane-dense sigmoid outputs
    """
    t = x_ref.shape[0]
    da = w1_ref.shape[0]
    r = w2_ref.shape[0]
    bc_row = _round_up(da + r, 8)

    mm_dtype = x_ref.dtype                       # bf16 fast path / f32 exact path
    w1 = w1_ref[...].astype(mm_dtype)
    w2 = w2_ref[...]
    wc = wc_ref[...].astype(mm_dtype)
    b1 = bias_ref[0:da, :]                       # (DA, 1), broadcast over lanes
    b2 = bias_ref[da:da + r, :]                  # (R, 1)
    bc = bias_ref[bc_row:bc_row + 1, :]          # (1, 1)

    # Pass 1: attention logits s_t and folded-classifier projections z_t for each
    # time step.  Static trip count (t == 8) -> fully unrolled; every matmul keeps
    # the big TILE dimension on the MXU's streaming side.
    s_list, z_list = [], []
    for ti in range(t):
        xt = x_ref[ti]                                                        # (F, TILE)
        h = jnp.tanh(jnp.dot(w1, xt, preferred_element_type=jnp.float32) + b1)  # (DA, TILE) f32
        s_list.append(jnp.dot(w2, h, preferred_element_type=jnp.float32) + b2)  # (R, TILE)  f32
        z_list.append(jnp.dot(wc, xt, preferred_element_type=jnp.float32))      # (R, TILE)  f32

    # Softmax over time == over the unrolled list: pure elementwise VPU/EUP work.
    # (nn.Dropout(0.3) on the attention weights is identity at inference time.)
    m = functools.reduce(jnp.maximum, s_list)                                 # (R, TILE)
    denom = jnp.zeros_like(m)
    num = jnp.zeros_like(m)
    for ti in range(t):
        e = jnp.exp(s_list[ti] - m)
        denom = denom + e
        num = num + e * z_list[ti]
    # sum_t softmax(s)[t] * z[t] == (sum_t e_t * z_t) / (sum_t e_t)
    acc = num * pl.reciprocal(denom, approx=False)                            # (R, TILE)

    # Folded fc1+fc2 head: out = sigmoid(sum_r acc[r] + bc), stored lane-dense.
    pre = jnp.sum(acc, axis=0, keepdims=True) + bc                            # (1, TILE)
    o_ref[...] = jax.nn.sigmoid(pre).astype(o_ref.dtype)


def video_classifier_forward(x, kernel_params, *, bs_tile=1024, x_dtype=jnp.bfloat16):
    """x: (bs, t, f) float32 -> (bs,) float32 sigmoid probabilities (eval mode)."""
    bs, t, f = x.shape
    w1, w2, wc, bias_all = kernel_params
    da = w1.shape[0]
    r = w2.shape[0]
    bias_rows = bias_all.shape[0]

    # ---- batch tiling: big tiles amortize the ~0.35us per-grid-step cost; when the
    # batch spans several tiles, size them to a multiple of 128 lanes and keep
    # n_tiles >= 2 so the "parallel" axis can split across v7x's two TensorCores.
    if bs <= bs_tile:
        tile, n_tiles = bs, 1
    else:
        n_tiles = -(-bs // bs_tile)
        tile = _round_up(-(-bs // n_tiles), 128)
        n_tiles = -(-bs // tile)
    bs_p = n_tiles * tile
    if bs_p != bs:
        x = jnp.pad(x, ((0, bs_p - bs), (0, 0), (0, 0)))  # finite zero rows, sliced off below

    # Lane-dense x layout: batch on the minor axis -> no (f=32 -> 128) lane padding in
    # HBM/VMEM and the bf16 cast genuinely halves the streamed bytes.  This is one XLA
    # transpose outside the kernel; in a real pipeline produce x in this layout upstream.
    xT = jnp.transpose(x, (1, 2, 0)).astype(x_dtype)      # (t, f, bs_p)

    # Generation-aware VMEM cap (v5e scoped default is only 16 MiB; v7x physical is 64 MiB).
    x_block_bytes = t * f * tile * jnp.dtype(x_dtype).itemsize
    vmem_limit = int(min(96 * 1024 * 1024,
                         max(32 * 1024 * 1024, 8 * x_block_bytes + 16 * 1024 * 1024)))

    out = pl.pallas_call(
        _video_classifier_kernel,
        out_shape=jax.ShapeDtypeStruct((1, bs_p), jnp.float32),
        grid_spec=pltpu.PrefetchScalarGridSpec(
            num_scalar_prefetch=0,
            grid=(n_tiles,),
            in_specs=[
                # TODO(synk): on v6e, if xprof shows exposed x DMA per step, add
                # pipeline_mode=pl.Buffered(3) to this spec.
                pl.BlockSpec((t, f, tile), lambda b: (0, 0, b)),
                pl.BlockSpec((da, f), lambda b: (0, 0)),
                pl.BlockSpec((r, da), lambda b: (0, 0)),
                pl.BlockSpec((r, f), lambda b: (0, 0)),
                pl.BlockSpec((bias_rows, 1), lambda b: (0, 0)),
            ],
            out_specs=pl.BlockSpec((1, tile), lambda b: (0, b)),  # lane-dense output block
        ),
        compiler_params=pltpu.CompilerParams(
            dimension_semantics=("parallel",),
            vmem_limit_bytes=vmem_limit,
        ),
    )(xT, w1, w2, wc, bias_all)
    return out.reshape(bs_p)[:bs]


def make_params(key, feature_size, da=64, r=3, hidden=32):
    """Synthetic parameters with PyTorch layouts, plus kernel-folded layouts."""
    ks = jax.random.split(key, 8)
    W1 = jax.random.normal(ks[0], (da, feature_size), jnp.float32) * 0.1   # Linear(f, da)
    b1 = jax.random.normal(ks[1], (da,), jnp.float32) * 0.1
    W2 = jax.random.normal(ks[2], (r, da), jnp.float32) * 0.1              # Linear(da, r)
    b2 = jax.random.normal(ks[3], (r,), jnp.float32) * 0.1
    Wfc1 = jax.random.normal(ks[4], (hidden, feature_size * r), jnp.float32) * 0.1
    bfc1 = jax.random.normal(ks[5], (hidden,), jnp.float32) * 0.1
    Wfc2 = jax.random.normal(ks[6], (1, hidden), jnp.float32) * 0.1
    bfc2 = jax.random.normal(ks[7], (1,), jnp.float32) * 0.1

    # Fold fc1+fc2 (exact: no nonlinearity between them; dropout is identity in eval).
    # flat index k = f_idx * r + r_idx  (m is (bs, f, r) flattened row-major).
    wfold = (Wfc2 @ Wfc1).reshape(feature_size, r)        # (f, r)
    wc = wfold.T                                          # (r, f)
    bc = (Wfc2 @ bfc1 + bfc2)[0]                          # scalar

    # Pack all small constants into one column array on 8-aligned rows (fewer windows).
    bc_row = _round_up(da + r, 8)
    bias_rows = _round_up(bc_row + 1, 8)
    bias_all = jnp.zeros((bias_rows, 1), jnp.float32)
    bias_all = bias_all.at[0:da, 0].set(b1)
    bias_all = bias_all.at[da:da + r, 0].set(b2)
    bias_all = bias_all.at[bc_row, 0].set(bc)

    torch_style = (W1, b1, W2, b2, Wfc1, bfc1, Wfc2, bfc2)
    kernel_style = (W1, W2, wc, bias_all)
    return torch_style, kernel_style


def reference_forward(x, torch_params):
    """Pure-JAX mirror of the PyTorch forward (eval mode, return_attention=False)."""
    W1, b1, W2, b2, Wfc1, bfc1, Wfc2, bfc2 = torch_params
    bs = x.shape[0]
    s = jnp.tanh(x @ W1.T + b1) @ W2.T + b2                # (bs, t, r)
    attn = jax.nn.softmax(s, axis=1)                       # softmax over time
    m = jnp.einsum("btf,btr->bfr", x, attn)                # torch.bmm(x^T, attn)
    flat = m.reshape(bs, -1)
    h = flat @ Wfc1.T + bfc1
    out = jax.nn.sigmoid(h @ Wfc2.T + bfc2)
    return out.reshape(bs)


if __name__ == "__main__":
    # Shapes implied by the module: feature_size = 32, r = 3, da = 64, hidden = 32, t = 8.
    key = jax.random.PRNGKey(0)
    kx, kp, kx2 = jax.random.split(key, 3)
    torch_params, kernel_params = make_params(kp, feature_size=32, da=64, r=3, hidden=32)

    # Case 1: small single-tile batch, exact f32 path.
    x_small = jax.random.normal(kx, (4, 8, 32), jnp.float32)
    out_f32 = jax.block_until_ready(
        video_classifier_forward(x_small, kernel_params, x_dtype=jnp.float32))
    ref_small = reference_forward(x_small, torch_params)
    assert out_f32.shape == (4,)
    assert jnp.allclose(out_f32, ref_small, atol=1e-4, rtol=1e-4), (out_f32, ref_small)

    # Case 2: multi-tile grid + batch padding, bf16-x fast path (default dtype).
    x_big = jax.random.normal(kx2, (300, 8, 32), jnp.float32)
    out_bf16 = jax.block_until_ready(
        video_classifier_forward(x_big, kernel_params, bs_tile=128))
    ref_big = reference_forward(x_big, torch_params)
    assert out_bf16.shape == (300,)
    assert jnp.allclose(out_bf16, ref_big, atol=2e-2, rtol=2e-2), float(
        jnp.max(jnp.abs(out_bf16 - ref_big)))

    print("KERNEL_OK")
</pallas_src>

<mosaic_0001>
module attributes {stable_mosaic.version = 11 : i64} {
  func.func @_video_classifier_kernel(%arg0: i32, %arg1: memref<8x32x4xf32, #tpu.memory_space<vmem>>, %arg2: memref<64x32xf32, #tpu.memory_space<vmem>>, %arg3: memref<3x64xf32, #tpu.memory_space<vmem>>, %arg4: memref<3x32xf32, #tpu.memory_space<vmem>>, %arg5: memref<80x1xf32, #tpu.memory_space<vmem>>, %arg6: memref<1x4xf32, #tpu.memory_space<vmem>>) attributes {dimension_semantics = [#tpu.dimension_semantics<parallel>], iteration_bounds = array<i64: 1>, scalar_prefetch = 0 : i64, scratch_operands = 0 : i64, tpu.core_type = #tpu.core_type<tc>, window_params = [{transform_indices = @transform_0, window_bounds = array<i64: 8, 32, 4>}, {pipeline_mode = #tpu.pipeline_mode<synchronous>, transform_indices = @transform_1, window_bounds = array<i64: 64, 32>}, {pipeline_mode = #tpu.pipeline_mode<synchronous>, transform_indices = @transform_2, window_bounds = array<i64: 3, 64>}, {pipeline_mode = #tpu.pipeline_mode<synchronous>, transform_indices = @transform_3, window_bounds = array<i64: 3, 32>}, {pipeline_mode = #tpu.pipeline_mode<synchronous>, transform_indices = @transform_4, window_bounds = array<i64: 80, 1>}, {transform_indices = @transform_5, window_bounds = array<i64: 1, 4>}]} {
    %c0 = arith.constant 0 : index
    %c0_0 = arith.constant 0 : index
    %0 = vector.load %arg2[%c0, %c0_0] : memref<64x32xf32, #tpu.memory_space<vmem>>, vector<64x32xf32>
    %c0_1 = arith.constant 0 : index
    %c0_2 = arith.constant 0 : index
    %1 = vector.load %arg3[%c0_1, %c0_2] : memref<3x64xf32, #tpu.memory_space<vmem>>, vector<3x64xf32>
    %c0_3 = arith.constant 0 : index
    %c0_4 = arith.constant 0 : index
    %2 = vector.load %arg4[%c0_3, %c0_4] : memref<3x32xf32, #tpu.memory_space<vmem>>, vector<3x32xf32>
    %c0_5 = arith.constant 0 : index
    %c0_6 = arith.constant 0 : index
    %3 = vector.load %arg5[%c0_5, %c0_6] : memref<80x1xf32, #tpu.memory_space<vmem>>, vector<64x1xf32>
    %c64 = arith.constant 64 : index
    %c0_7 = arith.constant 0 : index
    %4 = vector.load %arg5[%c64, %c0_7] : memref<80x1xf32, #tpu.memory_space<vmem>>, vector<3x1xf32>
    %c72 = arith.constant 72 : index
    %c0_8 = arith.constant 0 : index
    %5 = vector.load %arg5[%c72, %c0_8] : memref<80x1xf32, #tpu.memory_space<vmem>>, vector<1x1xf32>
    %c0_9 = arith.constant 0 : index
    %c0_10 = arith.constant 0 : index
    %c0_11 = arith.constant 0 : index
    %6 = vector.load %arg1[%c0_9, %c0_10, %c0_11] : memref<8x32x4xf32, #tpu.memory_space<vmem>>, vector<1x32x4xf32>
    %7 = vector.shape_cast %6 : vector<1x32x4xf32> to vector<32x4xf32>
    %cst = arith.constant dense<0.000000e+00> : vector<64x4xf32>
    %8 = tpu.matmul %0, %7, %cst {dimension_numbers = #tpu.dot_dimension_numbers<[1], [0], [0], [1], [0, 0, 1, 1], [], []>} : vector<64x32xf32>, vector<32x4xf32>, vector<64x4xf32> -> vector<64x4xf32>
    %9 = vector.broadcast %3 : vector<64x1xf32> to vector<64x4xf32>
    %10 = arith.addf %8, %9 : vector<64x4xf32>
    %11 = math.tanh %10 : vector<64x4xf32>
    %cst_12 = arith.constant dense<0.000000e+00> : vector<3x4xf32>
    %12 = tpu.matmul %1, %11, %cst_12 {dimension_numbers = #tpu.dot_dimension_numbers<[1], [0], [0], [1], [0, 0, 1, 1], [], []>} : vector<3x64xf32>, vector<64x4xf32>, vector<3x4xf32> -> vector<3x4xf32>
    %13 = vector.broadcast %4 : vector<3x1xf32> to vector<3x4xf32>
    %14 = arith.addf %12, %13 : vector<3x4xf32>
    %cst_13 = arith.constant dense<0.000000e+00> : vector<3x4xf32>
    %15 = tpu.matmul %2, %7, %cst_13 {dimension_numbers = #tpu.dot_dimension_numbers<[1], [0], [0], [1], [0, 0, 1, 1], [], []>} : vector<3x32xf32>, vector<32x4xf32>, vector<3x4xf32> -> vector<3x4xf32>
    %c1 = arith.constant 1 : index
    %c0_14 = arith.constant 0 : index
    %c0_15 = arith.constant 0 : index
    %16 = vector.load %arg1[%c1, %c0_14, %c0_15] : memref<8x32x4xf32, #tpu.memory_space<vmem>>, vector<1x32x4xf32>
    %17 = vector.shape_cast %16 : vector<1x32x4xf32> to vector<32x4xf32>
    %cst_16 = arith.constant dense<0.000000e+00> : vector<64x4xf32>
    %18 = tpu.matmul %0, %17, %cst_16 {dimension_numbers = #tpu.dot_dimension_numbers<[1], [0], [0], [1], [0, 0, 1, 1], [], []>} : vector<64x32xf32>, vector<32x4xf32>, vector<64x4xf32> -> vector<64x4xf32>
    %19 = vector.broadcast %3 : vector<64x1xf32> to vector<64x4xf32>
    %20 = arith.addf %18, %19 : vector<64x4xf32>
    %21 = math.tanh %20 : vector<64x4xf32>
    %cst_17 = arith.constant dense<0.000000e+00> : vector<3x4xf32>
    %22 = tpu.matmul %1, %21, %cst_17 {dimension_numbers = #tpu.dot_dimension_numbers<[1], [0], [0], [1], [0, 0, 1, 1], [], []>} : vector<3x64xf32>, vector<64x4xf32>, vector<3x4xf32> -> vector<3x4xf32>
    %23 = vector.broadcast %4 : vector<3x1xf32> to vector<3x4xf32>
    %24 = arith.addf %22, %23 : vector<3x4xf32>
    %cst_18 = arith.constant dense<0.000000e+00> : vector<3x4xf32>
    %25 = tpu.matmul %2, %17, %cst_18 {dimension_numbers = #tpu.dot_dimension_numbers<[1], [0], [0], [1], [0, 0, 1, 1], [], []>} : vector<3x32xf32>, vector<32x4xf32>, vector<3x4xf32> -> vector<3x4xf32>
    %c2 = arith.constant 2 : index
    %c0_19 = arith.constant 0 : index
    %c0_20 = arith.constant 0 : index
    %26 = vector.load %arg1[%c2, %c0_19, %c0_20] : memref<8x32x4xf32, #tpu.memory_space<vmem>>, vector<1x32x4xf32>
    %27 = vector.shape_cast %26 : vector<1x32x4xf32> to vector<32x4xf32>
    %cst_21 = arith.constant dense<0.000000e+00> : vector<64x4xf32>
    %28 = tpu.matmul %0, %27, %cst_21 {dimension_numbers = #tpu.dot_dimension_numbers<[1], [0], [0], [1], [0, 0, 1, 1], [], []>} : vector<64x32xf32>, vector<32x4xf32>, vector<64x4xf32> -> vector<64x4xf32>
    %29 = vector.broadcast %3 : vector<64x1xf32> to vector<64x4xf32>
    %30 = arith.addf %28, %29 : vector<64x4xf32>
    %31 = math.tanh %30 : vector<64x4xf32>
    %cst_22 = arith.constant dense<0.000000e+00> : vector<3x4xf32>
    %32 = tpu.matmul %1, %31, %cst_22 {dimension_numbers = #tpu.dot_dimension_numbers<[1], [0], [0], [1], [0, 0, 1, 1], [], []>} : vector<3x64xf32>, vector<64x4xf32>, vector<3x4xf32> -> vector<3x4xf32>
    %33 = vector.broadcast %4 : vector<3x1xf32> to vector<3x4xf32>
    %34 = arith.addf %32, %33 : vector<3x4xf32>
    %cst_23 = arith.constant dense<0.000000e+00> : vector<3x4xf32>
    %35 = tpu.matmul %2, %27, %cst_23 {dimension_numbers = #tpu.dot_dimension_numbers<[1], [0], [0], [1], [0, 0, 1, 1], [], []>} : vector<3x32xf32>, vector<32x4xf32>, vector<3x4xf32> -> vector<3x4xf32>
    %c3 = arith.constant 3 : index
    %c0_24 = arith.constant 0 : index
    %c0_25 = arith.constant 0 : index
    %36 = vector.load %arg1[%c3, %c0_24, %c0_25] : memref<8x32x4xf32, #tpu.memory_space<vmem>>, vector<1x32x4xf32>
    %37 = vector.shape_cast %36 : vector<1x32x4xf32> to vector<32x4xf32>
    %cst_26 = arith.constant dense<0.000000e+00> : vector<64x4xf32>
    %38 = tpu.matmul %0, %37, %cst_26 {dimension_numbers = #tpu.dot_dimension_numbers<[1], [0], [0], [1], [0, 0, 1, 1], [], []>} : vector<64x32xf32>, vector<32x4xf32>, vector<64x4xf32> -> vector<64x4xf32>
    %39 = vector.broadcast %3 : vector<64x1xf32> to vector<64x4xf32>
    %40 = arith.addf %38, %39 : vector<64x4xf32>
    %41 = math.tanh %40 : vector<64x4xf32>
    %cst_27 = arith.constant dense<0.000000e+00> : vector<3x4xf32>
    %42 = tpu.matmul %1, %41, %cst_27 {dimension_numbers = #tpu.dot_dimension_numbers<[1], [0], [0], [1], [0, 0, 1, 1], [], []>} : vector<3x64xf32>, vector<64x4xf32>, vector<3x4xf32> -> vector<3x4xf32>
    %43 = vector.broadcast %4 : vector<3x1xf32> to vector<3x4xf32>
    %44 = arith.addf %42, %43 : vector<3x4xf32>
    %cst_28 = arith.constant dense<0.000000e+00> : vector<3x4xf32>
    %45 = tpu.matmul %2, %37, %cst_28 {dimension_numbers = #tpu.dot_dimension_numbers<[1], [0], [0], [1], [0, 0, 1, 1], [], []>} : vector<3x32xf32>, vector<32x4xf32>, vector<3x4xf32> -> vector<3x4xf32>
    %c4 = arith.constant 4 : index
    %c0_29 = arith.constant 0 : index
    %c0_30 = arith.constant 0 : index
    %46 = vector.load %arg1[%c4, %c0_29, %c0_30] : memref<8x32x4xf32, #tpu.memory_space<vmem>>, vector<1x32x4xf32>
    %47 = vector.shape_cast %46 : vector<1x32x4xf32> to vector<32x4xf32>
    %cst_31 = arith.constant dense<0.000000e+00> : vector<64x4xf32>
    %48 = tpu.matmul %0, %47, %cst_31 {dimension_numbers = #tpu.dot_dimension_numbers<[1], [0], [0], [1], [0, 0, 1, 1], [], []>} : vector<64x32xf32>, vector<32x4xf32>, vector<64x4xf32> -> vector<64x4xf32>
    %49 = vector.broadcast %3 : vector<64x1xf32> to vector<64x4xf32>
    %50 = arith.addf %48, %49 : vector<64x4xf32>
    %51 = math.tanh %50 : vector<64x4xf32>
    %cst_32 = arith.constant dense<0.000000e+00> : vector<3x4xf32>
    %52 = tpu.matmul %1, %51, %cst_32 {dimension_numbers = #tpu.dot_dimension_numbers<[1], [0], [0], [1], [0, 0, 1, 1], [], []>} : vector<3x64xf32>, vector<64x4xf32>, vector<3x4xf32> -> vector<3x4xf32>
    %53 = vector.broadcast %4 : vector<3x1xf32> to vector<3x4xf32>
    %54 = arith.addf %52, %53 : vector<3x4xf32>
    %cst_33 = arith.constant dense<0.000000e+00> : vector<3x4xf32>
    %55 = tpu.matmul %2, %47, %cst_33 {dimension_numbers = #tpu.dot_dimension_numbers<[1], [0], [0], [1], [0, 0, 1, 1], [], []>} : vector<3x32xf32>, vector<32x4xf32>, vector<3x4xf32> -> vector<3x4xf32>
    %c5 = arith.constant 5 : index
    %c0_34 = arith.constant 0 : index
    %c0_35 = arith.constant 0 : index
    %56 = vector.load %arg1[%c5, %c0_34, %c0_35] : memref<8x32x4xf32, #tpu.memory_space<vmem>>, vector<1x32x4xf32>
    %57 = vector.shape_cast %56 : vector<1x32x4xf32> to vector<32x4xf32>
    %cst_36 = arith.constant dense<0.000000e+00> : vector<64x4xf32>
    %58 = tpu.matmul %0, %57, %cst_36 {dimension_numbers = #tpu.dot_dimension_numbers<[1], [0], [0], [1], [0, 0, 1, 1], [], []>} : vector<64x32xf32>, vector<32x4xf32>, vector<64x4xf32> -> vector<64x4xf32>
    %59 = vector.broadcast %3 : vector<64x1xf32> to vector<64x4xf32>
    %60 = arith.addf %58, %59 : vector<64x4xf32>
    %61 = math.tanh %60 : vector<64x4xf32>
    %cst_37 = arith.constant dense<0.000000e+00> : vector<3x4xf32>
    %62 = tpu.matmul %1, %61, %cst_37 {dimension_numbers = #tpu.dot_dimension_numbers<[1], [0], [0], [1], [0, 0, 1, 1], [], []>} : vector<3x64xf32>, vector<64x4xf32>, vector<3x4xf32> -> vector<3x4xf32>
    %63 = vector.broadcast %4 : vector<3x1xf32> to vector<3x4xf32>
    %64 = arith.addf %62, %63 : vector<3x4xf32>
    %cst_38 = arith.constant dense<0.000000e+00> : vector<3x4xf32>
    %65 = tpu.matmul %2, %57, %cst_38 {dimension_numbers = #tpu.dot_dimension_numbers<[1], [0], [0], [1], [0, 0, 1, 1], [], []>} : vector<3x32xf32>, vector<32x4xf32>, vector<3x4xf32> -> vector<3x4xf32>
    %c6 = arith.constant 6 : index
    %c0_39 = arith.constant 0 : index
    %c0_40 = arith.constant 0 : index
    %66 = vector.load %arg1[%c6, %c0_39, %c0_40] : memref<8x32x4xf32, #tpu.memory_space<vmem>>, vector<1x32x4xf32>
    %67 = vector.shape_cast %66 : vector<1x32x4xf32> to vector<32x4xf32>
    %cst_41 = arith.constant dense<0.000000e+00> : vector<64x4xf32>
    %68 = tpu.matmul %0, %67, %cst_41 {dimension_numbers = #tpu.dot_dimension_numbers<[1], [0], [0], [1], [0, 0, 1, 1], [], []>} : vector<64x32xf32>, vector<32x4xf32>, vector<64x4xf32> -> vector<64x4xf32>
    %69 = vector.broadcast %3 : vector<64x1xf32> to vector<64x4xf32>
    %70 = arith.addf %68, %69 : vector<64x4xf32>
    %71 = math.tanh %70 : vector<64x4xf32>
    %cst_42 = arith.constant dense<0.000000e+00> : vector<3x4xf32>
    %72 = tpu.matmul %1, %71, %cst_42 {dimension_numbers = #tpu.dot_dimension_numbers<[1], [0], [0], [1], [0, 0, 1, 1], [], []>} : vector<3x64xf32>, vector<64x4xf32>, vector<3x4xf32> -> vector<3x4xf32>
    %73 = vector.broadcast %4 : vector<3x1xf32> to vector<3x4xf32>
    %74 = arith.addf %72, %73 : vector<3x4xf32>
    %cst_43 = arith.constant dense<0.000000e+00> : vector<3x4xf32>
    %75 = tpu.matmul %2, %67, %cst_43 {dimension_numbers = #tpu.dot_dimension_numbers<[1], [0], [0], [1], [0, 0, 1, 1], [], []>} : vector<3x32xf32>, vector<32x4xf32>, vector<3x4xf32> -> vector<3x4xf32>
    %c7 = arith.constant 7 : index
    %c0_44 = arith.constant 0 : index
    %c0_45 = arith.constant 0 : index
    %76 = vector.load %arg1[%c7, %c0_44, %c0_45] : memref<8x32x4xf32, #tpu.memory_space<vmem>>, vector<1x32x4xf32>
    %77 = vector.shape_cast %76 : vector<1x32x4xf32> to vector<32x4xf32>
    %cst_46 = arith.constant dense<0.000000e+00> : vector<64x4xf32>
    %78 = tpu.matmul %0, %77, %cst_46 {dimension_numbers = #tpu.dot_dimension_numbers<[1], [0], [0], [1], [0, 0, 1, 1], [], []>} : vector<64x32xf32>, vector<32x4xf32>, vector<64x4xf32> -> vector<64x4xf32>
    %79 = vector.broadcast %3 : vector<64x1xf32> to vector<64x4xf32>
    %80 = arith.addf %78, %79 : vector<64x4xf32>
    %81 = math.tanh %80 : vector<64x4xf32>
    %cst_47 = arith.constant dense<0.000000e+00> : vector<3x4xf32>
    %82 = tpu.matmul %1, %81, %cst_47 {dimension_numbers = #tpu.dot_dimension_numbers<[1], [0], [0], [1], [0, 0, 1, 1], [], []>} : vector<3x64xf32>, vector<64x4xf32>, vector<3x4xf32> -> vector<3x4xf32>
    %83 = vector.broadcast %4 : vector<3x1xf32> to vector<3x4xf32>
    %84 = arith.addf %82, %83 : vector<3x4xf32>
    %cst_48 = arith.constant dense<0.000000e+00> : vector<3x4xf32>
    %85 = tpu.matmul %2, %77, %cst_48 {dimension_numbers = #tpu.dot_dimension_numbers<[1], [0], [0], [1], [0, 0, 1, 1], [], []>} : vector<3x32xf32>, vector<32x4xf32>, vector<3x4xf32> -> vector<3x4xf32>
    %86 = arith.maximumf %14, %24 : vector<3x4xf32>
    %87 = arith.maximumf %86, %34 : vector<3x4xf32>
    %88 = arith.maximumf %87, %44 : vector<3x4xf32>
    %89 = arith.maximumf %88, %54 : vector<3x4xf32>
    %90 = arith.maximumf %89, %64 : vector<3x4xf32>
    %91 = arith.maximumf %90, %74 : vector<3x4xf32>
    %92 = arith.maximumf %91, %84 : vector<3x4xf32>
    %cst_49 = arith.constant 0.000000e+00 : f32
    %93 = vector.broadcast %cst_49 : f32 to vector<3x4xf32>
    %cst_50 = arith.constant 0.000000e+00 : f32
    %94 = vector.broadcast %cst_50 : f32 to vector<3x4xf32>
    %95 = arith.subf %14, %92 : vector<3x4xf32>
    %96 = math.exp %95 : vector<3x4xf32>
    %97 = arith.addf %93, %96 : vector<3x4xf32>
    %98 = arith.mulf %96, %15 : vector<3x4xf32>
    %99 = arith.addf %94, %98 : vector<3x4xf32>
    %100 = arith.subf %24, %92 : vector<3x4xf32>
    %101 = math.exp %100 : vector<3x4xf32>
    %102 = arith.addf %97, %101 : vector<3x4xf32>
    %103 = arith.mulf %101, %25 : vector<3x4xf32>
    %104 = arith.addf %99, %103 : vector<3x4xf32>
    %105 = arith.subf %34, %92 : vector<3x4xf32>
    %106 = math.exp %105 : vector<3x4xf32>
    %107 = arith.addf %102, %106 : vector<3x4xf32>
    %108 = arith.mulf %106, %35 : vector<3x4xf32>
    %109 = arith.addf %104, %108 : vector<3x4xf32>
    %110 = arith.subf %44, %92 : vector<3x4xf32>
    %111 = math.exp %110 : vector<3x4xf32>
    %112 = arith.addf %107, %111 : vector<3x4xf32>
    %113 = arith.mulf %111, %45 : vector<3x4xf32>
    %114 = arith.addf %109, %113 : vector<3x4xf32>
    %115 = arith.subf %54, %92 : vector<3x4xf32>
    %116 = math.exp %115 : vector<3x4xf32>
    %117 = arith.addf %112, %116 : vector<3x4xf32>
    %118 = arith.mulf %116, %55 : vector<3x4xf32>
    %119 = arith.addf %114, %118 : vector<3x4xf32>
    %120 = arith.subf %64, %92 : vector<3x4xf32>
    %121 = math.exp %120 : vector<3x4xf32>
    %122 = arith.addf %117, %121 : vector<3x4xf32>
    %123 = arith.mulf %121, %65 : vector<3x4xf32>
    %124 = arith.addf %119, %123 : vector<3x4xf32>
    %125 = arith.subf %74, %92 : vector<3x4xf32>
    %126 = math.exp %125 : vector<3x4xf32>
    %127 = arith.addf %122, %126 : vector<3x4xf32>
    %128 = arith.mulf %126, %75 : vector<3x4xf32>
    %129 = arith.addf %124, %128 : vector<3x4xf32>
    %130 = arith.subf %84, %92 : vector<3x4xf32>
    %131 = math.exp %130 : vector<3x4xf32>
    %132 = arith.addf %127, %131 : vector<3x4xf32>
    %133 = arith.mulf %131, %85 : vector<3x4xf32>
    %134 = arith.addf %129, %133 : vector<3x4xf32>
    %135 = tpu.reciprocal %132 : vector<3x4xf32> -> vector<3x4xf32>
    %136 = arith.mulf %134, %135 : vector<3x4xf32>
    %cst_51 = arith.constant dense<0.000000e+00> : vector<4xf32>
    %137 = vector.multi_reduction <add>, %136, %cst_51 [0] : vector<3x4xf32> to vector<4xf32>
    %138 = vector.shape_cast %137 : vector<4xf32> to vector<1x4xf32>
    %139 = vector.broadcast %5 : vector<1x1xf32> to vector<1x4xf32>
    %140 = arith.addf %138, %139 : vector<1x4xf32>
    %141 = arith.negf %140 : vector<1x4xf32>
    %142 = math.exp %141 : vector<1x4xf32>
    %cst_52 = arith.constant 1.000000e+00 : f32
    %143 = vector.broadcast %cst_52 : f32 to vector<1x4xf32>
    %144 = arith.addf %143, %142 : vector<1x4xf32>
    %145 = arith.divf %143, %144 : vector<1x4xf32>
    %c0_53 = arith.constant 0 : index
    %c0_54 = arith.constant 0 : index
    %146 = vector.load %arg6[%c0_53, %c0_54] : memref<1x4xf32, #tpu.memory_space<vmem>>, vector<1x4xf32>
    tpu.vector_store %arg6[%c0_53, %c0_54], %145 {strides = array<i32>} : memref<1x4xf32, #tpu.memory_space<vmem>>, vector<1x4xf32>,
    return
  }
  func.func @transform_0(%arg0: i32) -> (i32, i32, i32) {
    %c0_i32 = arith.constant 0 : i32
    %c0_i32_0 = arith.constant 0 : i32
    %c0_i32_1 = arith.constant 0 : i32
    return %c0_i32, %c0_i32_0, %arg0 : i32, i32, i32
  }
  func.func @transform_1(%arg0: i32) -> (i32, i32) {
    %c0_i32 = arith.constant 0 : i32
    %c0_i32_0 = arith.constant 0 : i32
    %c0_i32_1 = arith.constant 0 : i32
    return %c0_i32, %c0_i32_0 : i32, i32
  }
  func.func @transform_2(%arg0: i32) -> (i32, i32) {
    %c0_i32 = arith.constant 0 : i32
    %c0_i32_0 = arith.constant 0 : i32
    %c0_i32_1 = arith.constant 0 : i32
    return %c0_i32, %c0_i32_0 : i32, i32
  }
  func.func @transform_3(%arg0: i32) -> (i32, i32) {
    %c0_i32 = arith.constant 0 : i32
    %c0_i32_0 = arith.constant 0 : i32
    %c0_i32_1 = arith.constant 0 : i32
    return %c0_i32, %c0_i32_0 : i32, i32
  }
  func.func @transform_4(%arg0: i32) -> (i32, i32) {
    %c0_i32 = arith.constant 0 : i32
    %c0_i32_0 = arith.constant 0 : i32
    %c0_i32_1 = arith.constant 0 : i32
    return %c0_i32, %c0_i32_0 : i32, i32
  }
  func.func @transform_5(%arg0: i32) -> (i32, i32) {
    %c0_i32 = arith.constant 0 : i32
    %c0_i32_0 = arith.constant 0 : i32
    return %c0_i32, %arg0 : i32, i32
  }
}

</mosaic_0001>

<llo_original>
// kernel: tpu_custom_call.1
$region0: #{tpu_custom_call.1}
  #allocation0 [shape = 'u32[]', space=smem, size = 0x4, offset = 0x4, fixed_abs, tag = 'smem constant byte address 0x4 - core index']
  #allocation1 [shape = 'u32[144,128]{1,0:T(1,128)}', space=vmem, size = 0x12000, scoped, tag = 'internal scratch']
  %s0 = inlined_call_operand.vmem [shape: f32[8,32,4], index: 0, kind: input, shape index: {}]
  %s1 = inlined_call_operand.vmem [shape: f32[64,32], index: 1, kind: input, shape index: {}]
  %s2 = inlined_call_operand.vmem [shape: f32[3,64], index: 2, kind: input, shape index: {}]
  %s3 = inlined_call_operand.vmem [shape: f32[3,32], index: 3, kind: input, shape index: {}]
  %s4 = inlined_call_operand.vmem [shape: f32[80,1], index: 4, kind: input, shape index: {}]
  %s5 = inlined_call_operand.hbm [shape: f32[1,4], index: 5, kind: output, shape index: {}]
  %s6 = sld [smem:[#allocation0]]
  $region30: #{tpu_custom_call.1} parent=0
    _
  %s8 = ssub.s32 1, %s6
  %s9 = scalar_select 0, %s8, %s6
  $region1: #{tpu_custom_call.1} parent=0
    #allocation2 [shape = 'u8[512]{0}', space=vmem, size = 0x400, scoped, tag = 'output window, operand 0, single buffered']
    #allocation3 [shape = 's32[1]{0}', space=sflag, size = 0x4, scoped, tag = 'scoped memory for tpu_custom_call.1']
    %10 = vsyncpa [#allocation3], 0
    // Predicated region
    $region2: #{tpu_custom_call.1} parent=1 // pred_check
      _
    $region3: #{tpu_custom_call.1} parent=1 // pred_check_branch
      %12 = sbr.rel (0) target = $region5
    $region4: #{tpu_custom_call.1} parent=1 // pred_region
      _
    $region5: #{tpu_custom_call.1} parent=1 // pred_fallthru
      _
    // Predicated region
    $region6: #{tpu_custom_call.1} parent=1 // pred_check
      _
    $region7: #{tpu_custom_call.1} parent=1 // pred_check_branch
      %14 = sbr.rel (0) target = $region9
    $region8: #{tpu_custom_call.1} parent=1 // pred_region
      _
    $region9: #{tpu_custom_call.1} parent=1 // pred_fallthru
      _
    // Predicated region
    $region10: #{tpu_custom_call.1} parent=1 // pred_check
      _
    $region11: #{tpu_custom_call.1} parent=1 // pred_check_branch
      %16 = sbr.rel (0) target = $region13
    $region12: #{tpu_custom_call.1} parent=1 // pred_region
      _
    $region13: #{tpu_custom_call.1} parent=1 // pred_fallthru
      _
    // Predicated region
    $region14: #{tpu_custom_call.1} parent=1 // pred_check
      _
    $region15: #{tpu_custom_call.1} parent=1 // pred_check_branch
      %18 = sbr.rel (0) target = $region17
    $region16: #{tpu_custom_call.1} parent=1 // pred_region
      _
    $region17: #{tpu_custom_call.1} parent=1 // pred_fallthru
      _
    // Predicated region
    $region18: #{tpu_custom_call.1} parent=1 // pred_check
      _
    $region19: #{tpu_custom_call.1} parent=1 // pred_check_branch
      %20 = sbr.rel (0) target = $region21
    $region20: #{tpu_custom_call.1} parent=1 // pred_region
      _
    $region21: #{tpu_custom_call.1} parent=1 // pred_fallthru
      _
    %v21 = vld [vmem:[%s1] sm:$0xff]
    %v22 = vld [vmem:[%s1 + $0x8] sm:$0xff]
    %v23 = vld [vmem:[%s1 + $0x10] sm:$0xff]
    %v24 = vld [vmem:[%s1 + $0x18] sm:$0xff]
    %v25 = vld [vmem:[%s1 + $0x20] sm:$0xff]
    %v26 = vld [vmem:[%s1 + $0x28] sm:$0xff]
    %v27 = vld [vmem:[%s1 + $0x30] sm:$0xff]
    %v28 = vld [vmem:[%s1 + $0x38] sm:$0xff]
    %v29 = vld [vmem:[%s2] sm:$0x7]
    %v30 = vld [vmem:[%s3] sm:$0x7]
    %v31 = vld [vmem:[%s4] sm:$0xff]
    %v32 = vld [vmem:[%s4 + $0x8] sm:$0xff]
    %v33 = vld [vmem:[%s4 + $0x10] sm:$0xff]
    %v34 = vld [vmem:[%s4 + $0x18] sm:$0xff]
    %v35 = vld [vmem:[%s4 + $0x20] sm:$0xff]
    %v36 = vld [vmem:[%s4 + $0x28] sm:$0xff]
    %v37 = vld [vmem:[%s4 + $0x30] sm:$0xff]
    %v38 = vld [vmem:[%s4 + $0x38] sm:$0xff]
    %v39 = vld [vmem:[%s4 + $0x40] sm:$0x7]
    %v40 = vld [vmem:[%s4 + $0x48] sm:$0x1]
    %v41 = vld [vmem:[%s0] sm:$0xff]
    %v42 = vld [vmem:[%s0 + $0x8] sm:$0xff]
    %v43 = vld [vmem:[%s0 + $0x10] sm:$0xff]
    %v44 = vld [vmem:[%s0 + $0x18] sm:$0xff]
    %46 = vset.pattern.permute.xlu0 0
    %47 = vperm.xlu0 %46, %v31
    %v48 = vpop.permute.xlu0 %47
    %51 = vset.pattern.permute.xlu0 0
    %52 = vperm.xlu0 %51, %v32
    %v53 = vpop.permute.xlu0 %52
    %56 = vset.pattern.permute.xlu0 0
    %57 = vperm.xlu0 %56, %v33
    %v58 = vpop.permute.xlu0 %57
    %61 = vset.pattern.permute.xlu0 0
    %62 = vperm.xlu0 %61, %v34
    %v63 = vpop.permute.xlu0 %62
    %66 = vset.pattern.permute.xlu0 0
    %67 = vperm.xlu0 %66, %v35
    %v68 = vpop.permute.xlu0 %67
    %71 = vset.pattern.permute.xlu0 0
    %72 = vperm.xlu0 %71, %v36
    %v73 = vpop.permute.xlu0 %72
    %76 = vset.pattern.permute.xlu0 0
    %77 = vperm.xlu0 %76, %v37
    %v78 = vpop.permute.xlu0 %77
    %81 = vset.pattern.permute.xlu0 0
    %82 = vperm.xlu0 %81, %v38
    %v83 = vpop.permute.xlu0 %82
    %vm85 = vcmask 261120
    %v87 = vsel %vm85, %v21, 0
    %v90 = vsel %vm85, %v22, 0
    %v93 = vsel %vm85, %v23, 0
    %v96 = vsel %vm85, %v24, 0
    %v99 = vsel %vm85, %v25, 0
    %v102 = vsel %vm85, %v26, 0
    %v105 = vsel %vm85, %v27, 0
    %v108 = vsel %vm85, %v28, 0
    %110 = vmatprep.subr.mxu0 0.0
    %111 = vmatpush1.msra.mxu0 %v41
    %112 = vmatprep.subr.mxu0 0.0
    %113 = vmatpush1.msra.mxu0 %v42
    %114 = vmatprep.subr.mxu0 0.0
    %115 = vmatpush1.msra.mxu0 %v43
    %116 = vmatprep.subr.mxu0 0.0
    %117 = vmatpush1.msra.mxu0 %v44
    %118 = vmatprep.subr.mxu0 0.0
    %119 = vmatpush1.msra.mxu0 0.0
    %120 = vmatprep.subr.mxu0 0.0
    %121 = vmatpush1.msra.mxu0 0.0
    %122 = vmatprep.subr.mxu0 0.0
    %123 = vmatpush1.msra.mxu0 0.0
    %124 = vmatprep.subr.mxu0 0.0
    %125 = vmatpush1.msra.mxu0 0.0
    %126 = vmatprep.subr.mxu0 0.0
    %127 = vmatpush1.msra.mxu0 0.0
    %128 = vmatprep.subr.mxu0 0.0
    %129 = vmatpush1.msra.mxu0 0.0
    %130 = vmatprep.subr.mxu0 0.0
    %131 = vmatpush1.msra.mxu0 0.0
    %132 = vmatprep.subr.mxu0 0.0
    %133 = vmatpush1.msra.mxu0 0.0
    %134 = vmatprep.subr.mxu0 0.0
    %135 = vmatpush1.msra.mxu0 0.0
    %136 = vmatprep.subr.mxu0 0.0
    %137 = vmatpush1.msra.mxu0 0.0
    %138 = vmatprep.subr.mxu0 0.0
    %139 = vmatpush1.msra.mxu0 0.0
    %140 = vmatprep.subr.mxu0 0.0
    %141 = vmatpush1.msra.mxu0 0.0
    %142 = vmatprep.subr.mxu0 0.0
    %143 = vmatpush1.msra.mxu0 0.0
    %144 = vmatprep.subr.mxu0 0.0
    %145 = vmatpush1.msra.mxu0 0.0
    %146 = vmatprep.subr.mxu0 0.0
    %147 = vmatpush1.msra.mxu0 0.0
    %148 = vmatprep.subr.mxu0 0.0
    %149 = vmatpush1.msra.mxu0 0.0
    %150 = vmatprep.subr.mxu0 0.0
    %151 = vmatpush1.msra.mxu0 0.0
    %152 = vmatprep.subr.mxu0 0.0
    %153 = vmatpush1.msra.mxu0 0.0
    %154 = vmatprep.subr.mxu0 0.0
    %155 = vmatpush1.msra.mxu0 0.0
    %156 = vmatprep.subr.mxu0 0.0
    %157 = vmatpush1.msra.mxu0 0.0
    %158 = vmatprep.subr.mxu0 0.0
    %159 = vmatpush1.msra.mxu0 0.0
    %160 = vmatprep.subr.mxu0 0.0
    %161 = vmatpush1.msra.mxu0 0.0
    %162 = vmatprep.subr.mxu0 0.0
    %163 = vmatpush1.msra.mxu0 0.0
    %164 = vmatprep.subr.mxu0 0.0
    %165 = vmatpush1.msra.mxu0 0.0
    %166 = vmatprep.subr.mxu0 0.0
    %167 = vmatpush1.msra.mxu0 0.0
    %168 = vmatprep.subr.mxu0 0.0
    %169 = vmatpush1.msra.mxu0 0.0
    %170 = vmatprep.subr.mxu0 0.0
    %171 = vmatpush1.msra.mxu0 0.0
    %172 = vmatprep.subr.mxu0 0.0
    %173 = vmatpush1.msra.mxu0 0.0
    %174 = vmatprep.mubr.f32.mxu0 0.0
    %175 = vmatmul.mubr.f32.gmra.mrb[0].mxu0 %v87
    %v176 = vpop.f32.mrb[0].mxu0
    %v177 = vadd.f32 %v48, %v176
    %v178 = vpop.f32.mrb[0].mxu0
    %179 = vmatprep.mubr.f32.mxu0 0.0
    %180 = vmatmul.mubr.f32.gmra.mrb[0].mxu0 %v90
    %v181 = vpop.f32.mrb[0].mxu0
    %v182 = vadd.f32 %v53, %v181
    %v183 = vpop.f32.mrb[0].mxu0
    %184 = vmatprep.mubr.f32.mxu0 0.0
    %185 = vmatmul.mubr.f32.gmra.mrb[0].mxu0 %v93
    %v186 = vpop.f32.mrb[0].mxu0
    %v187 = vadd.f32 %v58, %v186
    %v188 = vpop.f32.mrb[0].mxu0
    %189 = vmatprep.mubr.f32.mxu0 0.0
    %190 = vmatmul.mubr.f32.gmra.mrb[0].mxu0 %v96
    %v191 = vpop.f32.mrb[0].mxu0
    %v192 = vadd.f32 %v63, %v191
    %v193 = vpop.f32.mrb[0].mxu0
    %194 = vmatprep.mubr.f32.mxu0 0.0
    %195 = vmatmul.mubr.f32.gmra.mrb[0].mxu0 %v99
    %v196 = vpop.f32.mrb[0].mxu0
    %v197 = vadd.f32 %v68, %v196
    %v198 = vpop.f32.mrb[0].mxu0
    %199 = vmatprep.mubr.f32.mxu0 0.0
    %200 = vmatmul.mubr.f32.gmra.mrb[0].mxu0 %v102
    %v201 = vpop.f32.mrb[0].mxu0
    %v202 = vadd.f32 %v73, %v201
    %v203 = vpop.f32.mrb[0].mxu0
    %204 = vmatprep.mubr.f32.mxu0 0.0
    %205 = vmatmul.mubr.f32.gmra.mrb[0].mxu0 %v105
    %v206 = vpop.f32.mrb[0].mxu0
    %v207 = vadd.f32 %v78, %v206
    %v208 = vpop.f32.mrb[0].mxu0
    %209 = vmatprep.mubr.f32.mxu0 0.0
    %210 = vmatmul.mubr.f32.gmra.mrb[0].mxu0 %v108
    %v211 = vpop.f32.mrb[0].mxu0
    %v212 = vadd.f32 %v83, %v211
    %v213 = vpop.f32.mrb[0].mxu0
    %214 = vdwg.mxu0
    %v215 = vtanh.pop %v177
    %v216 = vtanh.pop %v182
    %v217 = vtanh.pop %v187
    %v218 = vtanh.pop %v192
    %v219 = vtanh.pop %v197
    %v220 = vtanh.pop %v202
    %v221 = vtanh.pop %v207
    %v222 = vtanh.pop %v212
    %224 = vset.pattern.permute.xlu0 0
    %225 = vperm.xlu0 %224, %v39
    %v226 = vpop.permute.xlu0 %225
    %vm228 = vcmask 523264
    %v230 = vsel %vm228, %v29, 0
    %232 = vmatprep.subr.mxu0 0.0
    %233 = vmatpush1.msra.mxu0 %v215
    %234 = vmatprep.subr.mxu0 0.0
    %235 = vmatpush1.msra.mxu0 %v216
    %236 = vmatprep.subr.mxu0 0.0
    %237 = vmatpush1.msra.mxu0 %v217
    %238 = vmatprep.subr.mxu0 0.0
    %239 = vmatpush1.msra.mxu0 %v218
    %240 = vmatprep.subr.mxu0 0.0
    %241 = vmatpush1.msra.mxu0 %v219
    %242 = vmatprep.subr.mxu0 0.0
    %243 = vmatpush1.msra.mxu0 %v220
    %244 = vmatprep.subr.mxu0 0.0
    %245 = vmatpush1.msra.mxu0 %v221
    %246 = vmatprep.subr.mxu0 0.0
    %247 = vmatpush1.msra.mxu0 %v222
    %248 = vmatprep.subr.mxu0 0.0
    %249 = vmatpush1.msra.mxu0 0.0
    %250 = vmatprep.subr.mxu0 0.0
    %251 = vmatpush1.msra.mxu0 0.0
    %252 = vmatprep.subr.mxu0 0.0
    %253 = vmatpush1.msra.mxu0 0.0
    %254 = vmatprep.subr.mxu0 0.0
    %255 = vmatpush1.msra.mxu0 0.0
    %256 = vmatprep.subr.mxu0 0.0
    %257 = vmatpush1.msra.mxu0 0.0
    %258 = vmatprep.subr.mxu0 0.0
    %259 = vmatpush1.msra.mxu0 0.0
    %260 = vmatprep.subr.mxu0 0.0
    %261 = vmatpush1.msra.mxu0 0.0
    %262 = vmatprep.subr.mxu0 0.0
    %263 = vmatpush1.msra.mxu0 0.0
    %264 = vmatprep.subr.mxu0 0.0
    %265 = vmatpush1.msra.mxu0 0.0
    %266 = vmatprep.subr.mxu0 0.0
    %267 = vmatpush1.msra.mxu0 0.0
    %268 = vmatprep.subr.mxu0 0.0
    %269 = vmatpush1.msra.mxu0 0.0
    %270 = vmatprep.subr.mxu0 0.0
    %271 = vmatpush1.msra.mxu0 0.0
    %272 = vmatprep.subr.mxu0 0.0
    %273 = vmatpush1.msra.mxu0 0.0
    %274 = vmatprep.subr.mxu0 0.0
    %275 = vmatpush1.msra.mxu0 0.0
    %276 = vmatprep.subr.mxu0 0.0
    %277 = vmatpush1.msra.mxu0 0.0
    %278 = vmatprep.subr.mxu0 0.0
    %279 = vmatpush1.msra.mxu0 0.0
    %280 = vmatprep.subr.mxu0 0.0
    %281 = vmatpush1.msra.mxu0 0.0
    %282 = vmatprep.subr.mxu0 0.0
    %283 = vmatpush1.msra.mxu0 0.0
    %284 = vmatprep.subr.mxu0 0.0
    %285 = vmatpush1.msra.mxu0 0.0
    %286 = vmatprep.subr.mxu0 0.0
    %287 = vmatpush1.msra.mxu0 0.0
    %288 = vmatprep.subr.mxu0 0.0
    %289 = vmatpush1.msra.mxu0 0.0
    %290 = vmatprep.subr.mxu0 0.0
    %291 = vmatpush1.msra.mxu0 0.0
    %292 = vmatprep.subr.mxu0 0.0
    %293 = vmatpush1.msra.mxu0 0.0
    %294 = vmatprep.subr.mxu0 0.0
    %295 = vmatpush1.msra.mxu0 0.0
    %296 = vmatprep.mubr.f32.mxu0 0.0
    %297 = vmatmul.mubr.f32.gmra.mrb[0].mxu0 %v230
    %v298 = vpop.f32.mrb[0].mxu0
    %v299 = vadd.f32 %v226, %v298
    %v300 = vpop.f32.mrb[0].mxu0
    %301 = vdwg.mxu0
    %v303 = vsel %vm85, %v30, 0
    %305 = vmatprep.subr.mxu0 0.0
    %306 = vmatpush1.msra.mxu0 %v41
    %307 = vmatprep.subr.mxu0 0.0
    %308 = vmatpush1.msra.mxu0 %v42
    %309 = vmatprep.subr.mxu0 0.0
    %310 = vmatpush1.msra.mxu0 %v43
    %311 = vmatprep.subr.mxu0 0.0
    %312 = vmatpush1.msra.mxu0 %v44
    %313 = vmatprep.subr.mxu0 0.0
    %314 = vmatpush1.msra.mxu0 0.0
    %315 = vmatprep.subr.mxu0 0.0
    %316 = vmatpush1.msra.mxu0 0.0
    %317 = vmatprep.subr.mxu0 0.0
    %318 = vmatpush1.msra.mxu0 0.0
    %319 = vmatprep.subr.mxu0 0.0
    %320 = vmatpush1.msra.mxu0 0.0
    %321 = vmatprep.subr.mxu0 0.0
    %322 = vmatpush1.msra.mxu0 0.0
    %323 = vmatprep.subr.mxu0 0.0
    %324 = vmatpush1.msra.mxu0 0.0
    %325 = vmatprep.subr.mxu0 0.0
    %326 = vmatpush1.msra.mxu0 0.0
    %327 = vmatprep.subr.mxu0 0.0
    %328 = vmatpush1.msra.mxu0 0.0
    %329 = vmatprep.subr.mxu0 0.0
    %330 = vmatpush1.msra.mxu0 0.0
    %331 = vmatprep.subr.mxu0 0.0
    %332 = vmatpush1.msra.mxu0 0.0
    %333 = vmatprep.subr.mxu0 0.0
    %334 = vmatpush1.msra.mxu0 0.0
    %335 = vmatprep.subr.mxu0 0.0
    %336 = vmatpush1.msra.mxu0 0.0
    %337 = vmatprep.subr.mxu0 0.0
    %338 = vmatpush1.msra.mxu0 0.0
    %339 = vmatprep.subr.mxu0 0.0
    %340 = vmatpush1.msra.mxu0 0.0
    %341 = vmatprep.subr.mxu0 0.0
    %342 = vmatpush1.msra.mxu0 0.0
    %343 = vmatprep.subr.mxu0 0.0
    %344 = vmatpush1.msra.mxu0 0.0
    %345 = vmatprep.subr.mxu0 0.0
    %346 = vmatpush1.msra.mxu0 0.0
    %347 = vmatprep.subr.mxu0 0.0
    %348 = vmatpush1.msra.mxu0 0.0
    %349 = vmatprep.subr.mxu0 0.0
    %350 = vmatpush1.msra.mxu0 0.0
    %351 = vmatprep.subr.mxu0 0.0
    %352 = vmatpush1.msra.mxu0 0.0
    %353 = vmatprep.subr.mxu0 0.0
    %354 = vmatpush1.msra.mxu0 0.0
    %355 = vmatprep.subr.mxu0 0.0
    %356 = vmatpush1.msra.mxu0 0.0
    %357 = vmatprep.subr.mxu0 0.0
    %358 = vmatpush1.msra.mxu0 0.0
    %359 = vmatprep.subr.mxu0 0.0
    %360 = vmatpush1.msra.mxu0 0.0
    %361 = vmatprep.subr.mxu0 0.0
    %362 = vmatpush1.msra.mxu0 0.0
    %363 = vmatprep.subr.mxu0 0.0
    %364 = vmatpush1.msra.mxu0 0.0
    %365 = vmatprep.subr.mxu0 0.0
    %366 = vmatpush1.msra.mxu0 0.0
    %367 = vmatprep.subr.mxu0 0.0
    %368 = vmatpush1.msra.mxu0 0.0
    %369 = vmatprep.mubr.f32.mxu0 0.0
    %370 = vmatmul.mubr.f32.gmra.mrb[0].mxu0 %v303
    %v371 = vpop.f32.mrb[0].mxu0
    %v372 = vadd.f32 0.0, %v371
    %v373 = vpop.f32.mrb[0].mxu0
    %374 = vdwg.mxu0
    %s375 = scalar_lea.vmem %s0, 32
    %v376 = vld [vmem:[%s375] sm:$0xff]
    %v377 = vld [vmem:[%s375 + $0x8] sm:$0xff]
    %v378 = vld [vmem:[%s375 + $0x10] sm:$0xff]
    %v379 = vld [vmem:[%s375 + $0x18] sm:$0xff]
    %380 = vmatprep.subr.mxu0 0.0
    %381 = vmatpush1.msra.mxu0 %v376
    %382 = vmatprep.subr.mxu0 0.0
    %383 = vmatpush1.msra.mxu0 %v377
    %384 = vmatprep.subr.mxu0 0.0
    %385 = vmatpush1.msra.mxu0 %v378
    %386 = vmatprep.subr.mxu0 0.0
    %387 = vmatpush1.msra.mxu0 %v379
    %388 = vmatprep.subr.mxu0 0.0
    %389 = vmatpush1.msra.mxu0 0.0
    %390 = vmatprep.subr.mxu0 0.0
    %391 = vmatpush1.msra.mxu0 0.0
    %392 = vmatprep.subr.mxu0 0.0
    %393 = vmatpush1.msra.mxu0 0.0
    %394 = vmatprep.subr.mxu0 0.0
    %395 = vmatpush1.msra.mxu0 0.0
    %396 = vmatprep.subr.mxu0 0.0
    %397 = vmatpush1.msra.mxu0 0.0
    %398 = vmatprep.subr.mxu0 0.0
    %399 = vmatpush1.msra.mxu0 0.0
    %400 = vmatprep.subr.mxu0 0.0
    %401 = vmatpush1.msra.mxu0 0.0
    %402 = vmatprep.subr.mxu0 0.0
    %403 = vmatpush1.msra.mxu0 0.0
    %404 = vmatprep.subr.mxu0 0.0
    %405 = vmatpush1.msra.mxu0 0.0
    %406 = vmatprep.subr.mxu0 0.0
    %407 = vmatpush1.msra.mxu0 0.0
    %408 = vmatprep.subr.mxu0 0.0
    %409 = vmatpush1.msra.mxu0 0.0
    %410 = vmatprep.subr.mxu0 0.0
    %411 = vmatpush1.msra.mxu0 0.0
    %412 = vmatprep.subr.mxu0 0.0
    %413 = vmatpush1.msra.mxu0 0.0
    %414 = vmatprep.subr.mxu0 0.0
    %415 = vmatpush1.msra.mxu0 0.0
    %416 = vmatprep.subr.mxu0 0.0
    %417 = vmatpush1.msra.mxu0 0.0
    %418 = vmatprep.subr.mxu0 0.0
    %419 = vmatpush1.msra.mxu0 0.0
    %420 = vmatprep.subr.mxu0 0.0
    %421 = vmatpush1.msra.mxu0 0.0
    %422 = vmatprep.subr.mxu0 0.0
    %423 = vmatpush1.msra.mxu0 0.0
    %424 = vmatprep.subr.mxu0 0.0
    %425 = vmatpush1.msra.mxu0 0.0
    %426 = vmatprep.subr.mxu0 0.0
    %427 = vmatpush1.msra.mxu0 0.0
    %428 = vmatprep.subr.mxu0 0.0
    %429 = vmatpush1.msra.mxu0 0.0
    %430 = vmatprep.subr.mxu0 0.0
    %431 = vmatpush1.msra.mxu0 0.0
    %432 = vmatprep.subr.mxu0 0.0
    %433 = vmatpush1.msra.mxu0 0.0
    %434 = vmatprep.subr.mxu0 0.0
    %435 = vmatpush1.msra.mxu0 0.0
    %436 = vmatprep.subr.mxu0 0.0
    %437 = vmatpush1.msra.mxu0 0.0
    %438 = vmatprep.subr.mxu0 0.0
    %439 = vmatpush1.msra.mxu0 0.0
    %440 = vmatprep.subr.mxu0 0.0
    %441 = vmatpush1.msra.mxu0 0.0
    %442 = vmatprep.subr.mxu0 0.0
    %443 = vmatpush1.msra.mxu0 0.0
    %444 = vmatprep.mubr.f32.mxu0 0.0
    %445 = vmatmul.mubr.f32.gmra.mrb[0].mxu0 %v87
    %v446 = vpop.f32.mrb[0].mxu0
    %v447 = vadd.f32 %v48, %v446
    %v448 = vpop.f32.mrb[0].mxu0
    %449 = vmatprep.mubr.f32.mxu0 0.0
    %450 = vmatmul.mubr.f32.gmra.mrb[0].mxu0 %v90
    %v451 = vpop.f32.mrb[0].mxu0
    %v452 = vadd.f32 %v53, %v451
    %v453 = vpop.f32.mrb[0].mxu0
    %454 = vmatprep.mubr.f32.mxu0 0.0
    %455 = vmatmul.mubr.f32.gmra.mrb[0].mxu0 %v93
    %v456 = vpop.f32.mrb[0].mxu0
    %v457 = vadd.f32 %v58, %v456
    %v458 = vpop.f32.mrb[0].mxu0
    %459 = vmatprep.mubr.f32.mxu0 0.0
    %460 = vmatmul.mubr.f32.gmra.mrb[0].mxu0 %v96
    %v461 = vpop.f32.mrb[0].mxu0
    %v462 = vadd.f32 %v63, %v461
    %v463 = vpop.f32.mrb[0].mxu0
    %464 = vmatprep.mubr.f32.mxu0 0.0
    %465 = vmatmul.mubr.f32.gmra.mrb[0].mxu0 %v99
    %v466 = vpop.f32.mrb[0].mxu0
    %v467 = vadd.f32 %v68, %v466
    %v468 = vpop.f32.mrb[0].mxu0
    %469 = vmatprep.mubr.f32.mxu0 0.0
    %470 = vmatmul.mubr.f32.gmra.mrb[0].mxu0 %v102
    %v471 = vpop.f32.mrb[0].mxu0
    %v472 = vadd.f32 %v73, %v471
    %v473 = vpop.f32.mrb[0].mxu0
    %474 = vmatprep.mubr.f32.mxu0 0.0
    %475 = vmatmul.mubr.f32.gmra.mrb[0].mxu0 %v105
    %v476 = vpop.f32.mrb[0].mxu0
    %v477 = vadd.f32 %v78, %v476
    %v478 = vpop.f32.mrb[0].mxu0
    %479 = vmatprep.mubr.f32.mxu0 0.0
    %480 = vmatmul.mubr.f32.gmra.mrb[0].mxu0 %v108
    %v481 = vpop.f32.mrb[0].mxu0
    %v482 = vadd.f32 %v83, %v481
    %v483 = vpop.f32.mrb[0].mxu0
    %484 = vdwg.mxu0
    %v485 = vtanh.pop %v447
    %v486 = vtanh.pop %v452
    %v487 = vtanh.pop %v457
    %v488 = vtanh.pop %v462
    %v489 = vtanh.pop %v467
    %v490 = vtanh.pop %v472
    %v491 = vtanh.pop %v477
    %v492 = vtanh.pop %v482
    %493 = vmatprep.subr.mxu0 0.0
    %494 = vmatpush1.msra.mxu0 %v485
    %495 = vmatprep.subr.mxu0 0.0
    %496 = vmatpush1.msra.mxu0 %v486
    %497 = vmatprep.subr.mxu0 0.0
    %498 = vmatpush1.msra.mxu0 %v487
    %499 = vmatprep.subr.mxu0 0.0
    %500 = vmatpush1.msra.mxu0 %v488
    %501 = vmatprep.subr.mxu0 0.0
    %502 = vmatpush1.msra.mxu0 %v489
    %503 = vmatprep.subr.mxu0 0.0
    %504 = vmatpush1.msra.mxu0 %v490
    %505 = vmatprep.subr.mxu0 0.0
    %506 = vmatpush1.msra.mxu0 %v491
    %507 = vmatprep.subr.mxu0 0.0
    %508 = vmatpush1.msra.mxu0 %v492
    %509 = vmatprep.subr.mxu0 0.0
    %510 = vmatpush1.msra.mxu0 0.0
    %511 = vmatprep.subr.mxu0 0.0
    %512 = vmatpush1.msra.mxu0 0.0
    %513 = vmatprep.subr.mxu0 0.0
    %514 = vmatpush1.msra.mxu0 0.0
    %515 = vmatprep.subr.mxu0 0.0
    %516 = vmatpush1.msra.mxu0 0.0
    %517 = vmatprep.subr.mxu0 0.0
    %518 = vmatpush1.msra.mxu0 0.0
    %519 = vmatprep.subr.mxu0 0.0
    %520 = vmatpush1.msra.mxu0 0.0
    %521 = vmatprep.subr.mxu0 0.0
    %522 = vmatpush1.msra.mxu0 0.0
    %523 = vmatprep.subr.mxu0 0.0
    %524 = vmatpush1.msra.mxu0 0.0
    %525 = vmatprep.subr.mxu0 0.0
    %526 = vmatpush1.msra.mxu0 0.0
    %527 = vmatprep.subr.mxu0 0.0
    %528 = vmatpush1.msra.mxu0 0.0
    %529 = vmatprep.subr.mxu0 0.0
    %530 = vmatpush1.msra.mxu0 0.0
    %531 = vmatprep.subr.mxu0 0.0
    %532 = vmatpush1.msra.mxu0 0.0
    %533 = vmatprep.subr.mxu0 0.0
    %534 = vmatpush1.msra.mxu0 0.0
    %535 = vmatprep.subr.mxu0 0.0
    %536 = vmatpush1.msra.mxu0 0.0
    %537 = vmatprep.subr.mxu0 0.0
    %538 = vmatpush1.msra.mxu0 0.0
    %539 = vmatprep.subr.mxu0 0.0
    %540 = vmatpush1.msra.mxu0 0.0
    %541 = vmatprep.subr.mxu0 0.0
    %542 = vmatpush1.msra.mxu0 0.0
    %543 = vmatprep.subr.mxu0 0.0
    %544 = vmatpush1.msra.mxu0 0.0
    %545 = vmatprep.subr.mxu0 0.0
    %546 = vmatpush1.msra.mxu0 0.0
    %547 = vmatprep.subr.mxu0 0.0
    %548 = vmatpush1.msra.mxu0 0.0
    %549 = vmatprep.subr.mxu0 0.0
    %550 = vmatpush1.msra.mxu0 0.0
    %551 = vmatprep.subr.mxu0 0.0
    %552 = vmatpush1.msra.mxu0 0.0
    %553 = vmatprep.subr.mxu0 0.0
    %554 = vmatpush1.msra.mxu0 0.0
    %555 = vmatprep.subr.mxu0 0.0
    %556 = vmatpush1.msra.mxu0 0.0
    %557 = vmatprep.mubr.f32.mxu0 0.0
    %558 = vmatmul.mubr.f32.gmra.mrb[0].mxu0 %v230
    %v559 = vpop.f32.mrb[0].mxu0
    %v560 = vadd.f32 %v226, %v559
    %v561 = vpop.f32.mrb[0].mxu0
    %562 = vdwg.mxu0
    %563 = vmatprep.subr.mxu0 0.0
    %564 = vmatpush1.msra.mxu0 %v376
    %565 = vmatprep.subr.mxu0 0.0
    %566 = vmatpush1.msra.mxu0 %v377
    %567 = vmatprep.subr.mxu0 0.0
    %568 = vmatpush1.msra.mxu0 %v378
    %569 = vmatprep.subr.mxu0 0.0
    %570 = vmatpush1.msra.mxu0 %v379
    %571 = vmatprep.subr.mxu0 0.0
    %572 = vmatpush1.msra.mxu0 0.0
    %573 = vmatprep.subr.mxu0 0.0
    %574 = vmatpush1.msra.mxu0 0.0
    %575 = vmatprep.subr.mxu0 0.0
    %576 = vmatpush1.msra.mxu0 0.0
    %577 = vmatprep.subr.mxu0 0.0
    %578 = vmatpush1.msra.mxu0 0.0
    %579 = vmatprep.subr.mxu0 0.0
    %580 = vmatpush1.msra.mxu0 0.0
    %581 = vmatprep.subr.mxu0 0.0
    %582 = vmatpush1.msra.mxu0 0.0
    %583 = vmatprep.subr.mxu0 0.0
    %584 = vmatpush1.msra.mxu0 0.0
    %585 = vmatprep.subr.mxu0 0.0
    %586 = vmatpush1.msra.mxu0 0.0
    %587 = vmatprep.subr.mxu0 0.0
    %588 = vmatpush1.msra.mxu0 0.0
    %589 = vmatprep.subr.mxu0 0.0
    %590 = vmatpush1.msra.mxu0 0.0
    %591 = vmatprep.subr.mxu0 0.0
    %592 = vmatpush1.msra.mxu0 0.0
    %593 = vmatprep.subr.mxu0 0.0
    %594 = vmatpush1.msra.mxu0 0.0
    %595 = vmatprep.subr.mxu0 0.0
    %596 = vmatpush1.msra.mxu0 0.0
    %597 = vmatprep.subr.mxu0 0.0
    %598 = vmatpush1.msra.mxu0 0.0
    %599 = vmatprep.subr.mxu0 0.0
    %600 = vmatpush1.msra.mxu0 0.0
    %601 = vmatprep.subr.mxu0 0.0
    %602 = vmatpush1.msra.mxu0 0.0
    %603 = vmatprep.subr.mxu0 0.0
    %604 = vmatpush1.msra.mxu0 0.0
    %605 = vmatprep.subr.mxu0 0.0
    %606 = vmatpush1.msra.mxu0 0.0
    %607 = vmatprep.subr.mxu0 0.0
    %608 = vmatpush1.msra.mxu0 0.0
    %609 = vmatprep.subr.mxu0 0.0
    %610 = vmatpush1.msra.mxu0 0.0
    %611 = vmatprep.subr.mxu0 0.0
    %612 = vmatpush1.msra.mxu0 0.0
    %613 = vmatprep.subr.mxu0 0.0
    %614 = vmatpush1.msra.mxu0 0.0
    %615 = vmatprep.subr.mxu0 0.0
    %616 = vmatpush1.msra.mxu0 0.0
    %617 = vmatprep.subr.mxu0 0.0
    %618 = vmatpush1.msra.mxu0 0.0
    %619 = vmatprep.subr.mxu0 0.0
    %620 = vmatpush1.msra.mxu0 0.0
    %621 = vmatprep.subr.mxu0 0.0
    %622 = vmatpush1.msra.mxu0 0.0
    %623 = vmatprep.subr.mxu0 0.0
    %624 = vmatpush1.msra.mxu0 0.0
    %625 = vmatprep.subr.mxu0 0.0
    %626 = vmatpush1.msra.mxu0 0.0
    %627 = vmatprep.mubr.f32.mxu0 0.0
    %628 = vmatmul.mubr.f32.gmra.mrb[0].mxu0 %v303
    %v629 = vpop.f32.mrb[0].mxu0
    %v630 = vadd.f32 0.0, %v629
    %v631 = vpop.f32.mrb[0].mxu0
    %632 = vdwg.mxu0
    %s633 = scalar_lea.vmem %s0, 64
    %v634 = vld [vmem:[%s633] sm:$0xff]
    %v635 = vld [vmem:[%s633 + $0x8] sm:$0xff]
    %v636 = vld [vmem:[%s633 + $0x10] sm:$0xff]
    %v637 = vld [vmem:[%s633 + $0x18] sm:$0xff]
    %638 = vmatprep.subr.mxu0 0.0
    %639 = vmatpush1.msra.mxu0 %v634
    %640 = vmatprep.subr.mxu0 0.0
    %641 = vmatpush1.msra.mxu0 %v635
    %642 = vmatprep.subr.mxu0 0.0
    %643 = vmatpush1.msra.mxu0 %v636
    %644 = vmatprep.subr.mxu0 0.0
    %645 = vmatpush1.msra.mxu0 %v637
    %646 = vmatprep.subr.mxu0 0.0
    %647 = vmatpush1.msra.mxu0 0.0
    %648 = vmatprep.subr.mxu0 0.0
    %649 = vmatpush1.msra.mxu0 0.0
    %650 = vmatprep.subr.mxu0 0.0
    %651 = vmatpush1.msra.mxu0 0.0
    %652 = vmatprep.subr.mxu0 0.0
    %653 = vmatpush1.msra.mxu0 0.0
    %654 = vmatprep.subr.mxu0 0.0
    %655 = vmatpush1.msra.mxu0 0.0
    %656 = vmatprep.subr.mxu0 0.0
    %657 = vmatpush1.msra.mxu0 0.0
    %658 = vmatprep.subr.mxu0 0.0
    %659 = vmatpush1.msra.mxu0 0.0
    %660 = vmatprep.subr.mxu0 0.0
    %661 = vmatpush1.msra.mxu0 0.0
    %662 = vmatprep.subr.mxu0 0.0
    %663 = vmatpush1.msra.mxu0 0.0
    %664 = vmatprep.subr.mxu0 0.0
    %665 = vmatpush1.msra.mxu0 0.0
    %666 = vmatprep.subr.mxu0 0.0
    %667 = vmatpush1.msra.mxu0 0.0
    %668 = vmatprep.subr.mxu0 0.0
    %669 = vmatpush1.msra.mxu0 0.0
    %670 = vmatprep.subr.mxu0 0.0
    %671 = vmatpush1.msra.mxu0 0.0
    %672 = vmatprep.subr.mxu0 0.0
    %673 = vmatpush1.msra.mxu0 0.0
    %674 = vmatprep.subr.mxu0 0.0
    %675 = vmatpush1.msra.mxu0 0.0
    %676 = vmatprep.subr.mxu0 0.0
    %677 = vmatpush1.msra.mxu0 0.0
    %678 = vmatprep.subr.mxu0 0.0
    %679 = vmatpush1.msra.mxu0 0.0
    %680 = vmatprep.subr.mxu0 0.0
    %681 = vmatpush1.msra.mxu0 0.0
    %682 = vmatprep.subr.mxu0 0.0
    %683 = vmatpush1.msra.mxu0 0.0
    %684 = vmatprep.subr.mxu0 0.0
    %685 = vmatpush1.msra.mxu0 0.0
    %686 = vmatprep.subr.mxu0 0.0
    %687 = vmatpush1.msra.mxu0 0.0
    %688 = vmatprep.subr.mxu0 0.0
    %689 = vmatpush1.msra.mxu0 0.0
    %690 = vmatprep.subr.mxu0 0.0
    %691 = vmatpush1.msra.mxu0 0.0
    %692 = vmatprep.subr.mxu0 0.0
    %693 = vmatpush1.msra.mxu0 0.0
    %694 = vmatprep.subr.mxu0 0.0
    %695 = vmatpush1.msra.mxu0 0.0
    %696 = vmatprep.subr.mxu0 0.0
    %697 = vmatpush1.msra.mxu0 0.0
    %698 = vmatprep.subr.mxu0 0.0
    %699 = vmatpush1.msra.mxu0 0.0
    %700 = vmatprep.subr.mxu0 0.0
    %701 = vmatpush1.msra.mxu0 0.0
    %702 = vmatprep.mubr.f32.mxu0 0.0
    %703 = vmatmul.mubr.f32.gmra.mrb[0].mxu0 %v87
    %v704 = vpop.f32.mrb[0].mxu0
    %v705 = vadd.f32 %v48, %v704
    %v706 = vpop.f32.mrb[0].mxu0
    %707 = vmatprep.mubr.f32.mxu0 0.0
    %708 = vmatmul.mubr.f32.gmra.mrb[0].mxu0 %v90
    %v709 = vpop.f32.mrb[0].mxu0
    %v710 = vadd.f32 %v53, %v709
    %v711 = vpop.f32.mrb[0].mxu0
    %712 = vmatprep.mubr.f32.mxu0 0.0
    %713 = vmatmul.mubr.f32.gmra.mrb[0].mxu0 %v93
    %v714 = vpop.f32.mrb[0].mxu0
    %v715 = vadd.f32 %v58, %v714
    %v716 = vpop.f32.mrb[0].mxu0
    %717 = vmatprep.mubr.f32.mxu0 0.0
    %718 = vmatmul.mubr.f32.gmra.mrb[0].mxu0 %v96
    %v719 = vpop.f32.mrb[0].mxu0
    %v720 = vadd.f32 %v63, %v719
    %v721 = vpop.f32.mrb[0].mxu0
    %722 = vmatprep.mubr.f32.mxu0 0.0
    %723 = vmatmul.mubr.f32.gmra.mrb[0].mxu0 %v99
    %v724 = vpop.f32.mrb[0].mxu0
    %v725 = vadd.f32 %v68, %v724
    %v726 = vpop.f32.mrb[0].mxu0
    %727 = vmatprep.mubr.f32.mxu0 0.0
    %728 = vmatmul.mubr.f32.gmra.mrb[0].mxu0 %v102
    %v729 = vpop.f32.mrb[0].mxu0
    %v730 = vadd.f32 %v73, %v729
    %v731 = vpop.f32.mrb[0].mxu0
    %732 = vmatprep.mubr.f32.mxu0 0.0
    %733 = vmatmul.mubr.f32.gmra.mrb[0].mxu0 %v105
    %v734 = vpop.f32.mrb[0].mxu0
    %v735 = vadd.f32 %v78, %v734
    %v736 = vpop.f32.mrb[0].mxu0
    %737 = vmatprep.mubr.f32.mxu0 0.0
    %738 = vmatmul.mubr.f32.gmra.mrb[0].mxu0 %v108
    %v739 = vpop.f32.mrb[0].mxu0
    %v740 = vadd.f32 %v83, %v739
    %v741 = vpop.f32.mrb[0].mxu0
    %742 = vdwg.mxu0
    %v743 = vtanh.pop %v705
    %v744 = vtanh.pop %v710
    %v745 = vtanh.pop %v715
    %v746 = vtanh.pop %v720
    %v747 = vtanh.pop %v725
    %v748 = vtanh.pop %v730
    %v749 = vtanh.pop %v735
    %v750 = vtanh.pop %v740
    %751 = vmatprep.subr.mxu0 0.0
    %752 = vmatpush1.msra.mxu0 %v743
    %753 = vmatprep.subr.mxu0 0.0
    %754 = vmatpush1.msra.mxu0 %v744
    %755 = vmatprep.subr.mxu0 0.0
    %756 = vmatpush1.msra.mxu0 %v745
    %757 = vmatprep.subr.mxu0 0.0
    %758 = vmatpush1.msra.mxu0 %v746
    %759 = vmatprep.subr.mxu0 0.0
    %760 = vmatpush1.msra.mxu0 %v747
    %761 = vmatprep.subr.mxu0 0.0
    %762 = vmatpush1.msra.mxu0 %v748
    %763 = vmatprep.subr.mxu0 0.0
    %764 = vmatpush1.msra.mxu0 %v749
    %765 = vmatprep.subr.mxu0 0.0
    %766 = vmatpush1.msra.mxu0 %v750
    %767 = vmatprep.subr.mxu0 0.0
    %768 = vmatpush1.msra.mxu0 0.0
    %769 = vmatprep.subr.mxu0 0.0
    %770 = vmatpush1.msra.mxu0 0.0
    %771 = vmatprep.subr.mxu0 0.0
    %772 = vmatpush1.msra.mxu0 0.0
    %773 = vmatprep.subr.mxu0 0.0
    %774 = vmatpush1.msra.mxu0 0.0
    %775 = vmatprep.subr.mxu0 0.0
    %776 = vmatpush1.msra.mxu0 0.0
    %777 = vmatprep.subr.mxu0 0.0
    %778 = vmatpush1.msra.mxu0 0.0
    %779 = vmatprep.subr.mxu0 0.0
    %780 = vmatpush1.msra.mxu0 0.0
    %781 = vmatprep.subr.mxu0 0.0
    %782 = vmatpush1.msra.mxu0 0.0
    %783 = vmatprep.subr.mxu0 0.0
    %784 = vmatpush1.msra.mxu0 0.0
    %785 = vmatprep.subr.mxu0 0.0
    %786 = vmatpush1.msra.mxu0 0.0
    %787 = vmatprep.subr.mxu0 0.0
    %788 = vmatpush1.msra.mxu0 0.0
    %789 = vmatprep.subr.mxu0 0.0
    %790 = vmatpush1.msra.mxu0 0.0
    %791 = vmatprep.subr.mxu0 0.0
    %792 = vmatpush1.msra.mxu0 0.0
    %793 = vmatprep.subr.mxu0 0.0
    %794 = vmatpush1.msra.mxu0 0.0
    %795 = vmatprep.subr.mxu0 0.0
    %796 = vmatpush1.msra.mxu0 0.0
    %797 = vmatprep.subr.mxu0 0.0
    %798 = vmatpush1.msra.mxu0 0.0
    %799 = vmatprep.subr.mxu0 0.0
    %800 = vmatpush1.msra.mxu0 0.0
    %801 = vmatprep.subr.mxu0 0.0
    %802 = vmatpush1.msra.mxu0 0.0
    %803 = vmatprep.subr.mxu0 0.0
    %804 = vmatpush1.msra.mxu0 0.0
    %805 = vmatprep.subr.mxu0 0.0
    %806 = vmatpush1.msra.mxu0 0.0
    %807 = vmatprep.subr.mxu0 0.0
    %808 = vmatpush1.msra.mxu0 0.0
    %809 = vmatprep.subr.mxu0 0.0
    %810 = vmatpush1.msra.mxu0 0.0
    %811 = vmatprep.subr.mxu0 0.0
    %812 = vmatpush1.msra.mxu0 0.0
    %813 = vmatprep.subr.mxu0 0.0
    %814 = vmatpush1.msra.mxu0 0.0
    %815 = vmatprep.mubr.f32.mxu0 0.0
    %816 = vmatmul.mubr.f32.gmra.mrb[0].mxu0 %v230
    %v817 = vpop.f32.mrb[0].mxu0
    %v818 = vadd.f32 %v226, %v817
    %v819 = vpop.f32.mrb[0].mxu0
    %820 = vdwg.mxu0
    %821 = vmatprep.subr.mxu0 0.0
    %822 = vmatpush1.msra.mxu0 %v634
    %823 = vmatprep.subr.mxu0 0.0
    %824 = vmatpush1.msra.mxu0 %v635
    %825 = vmatprep.subr.mxu0 0.0
    %826 = vmatpush1.msra.mxu0 %v636
    %827 = vmatprep.subr.mxu0 0.0
    %828 = vmatpush1.msra.mxu0 %v637
    %829 = vmatprep.subr.mxu0 0.0
    %830 = vmatpush1.msra.mxu0 0.0
    %831 = vmatprep.subr.mxu0 0.0
    %832 = vmatpush1.msra.mxu0 0.0
    %833 = vmatprep.subr.mxu0 0.0
    %834 = vmatpush1.msra.mxu0 0.0
    %835 = vmatprep.subr.mxu0 0.0
    %836 = vmatpush1.msra.mxu0 0.0
    %837 = vmatprep.subr.mxu0 0.0
    %838 = vmatpush1.msra.mxu0 0.0
    %839 = vmatprep.subr.mxu0 0.0
    %840 = vmatpush1.msra.mxu0 0.0
    %841 = vmatprep.subr.mxu0 0.0
    %842 = vmatpush1.msra.mxu0 0.0
    %843 = vmatprep.subr.mxu0 0.0
    %844 = vmatpush1.msra.mxu0 0.0
    %845 = vmatprep.subr.mxu0 0.0
    %846 = vmatpush1.msra.mxu0 0.0
    %847 = vmatprep.subr.mxu0 0.0
    %848 = vmatpush1.msra.mxu0 0.0
    %849 = vmatprep.subr.mxu0 0.0
    %850 = vmatpush1.msra.mxu0 0.0
    %851 = vmatprep.subr.mxu0 0.0
    %852 = vmatpush1.msra.mxu0 0.0
    %853 = vmatprep.subr.mxu0 0.0
    %854 = vmatpush1.msra.mxu0 0.0
    %855 = vmatprep.subr.mxu0 0.0
    %856 = vmatpush1.msra.mxu0 0.0
    %857 = vmatprep.subr.mxu0 0.0
    %858 = vmatpush1.msra.mxu0 0.0
    %859 = vmatprep.subr.mxu0 0.0
    %860 = vmatpush1.msra.mxu0 0.0
    %861 = vmatprep.subr.mxu0 0.0
    %862 = vmatpush1.msra.mxu0 0.0
    %863 = vmatprep.subr.mxu0 0.0
    %864 = vmatpush1.msra.mxu0 0.0
    %865 = vmatprep.subr.mxu0 0.0
    %866 = vmatpush1.msra.mxu0 0.0
    %867 = vmatprep.subr.mxu0 0.0
    %868 = vmatpush1.msra.mxu0 0.0
    %869 = vmatprep.subr.mxu0 0.0
    %870 = vmatpush1.msra.mxu0 0.0
    %871 = vmatprep.subr.mxu0 0.0
    %872 = vmatpush1.msra.mxu0 0.0
    %873 = vmatprep.subr.mxu0 0.0
    %874 = vmatpush1.msra.mxu0 0.0
    %875 = vmatprep.subr.mxu0 0.0
    %876 = vmatpush1.msra.mxu0 0.0
    %877 = vmatprep.subr.mxu0 0.0
    %878 = vmatpush1.msra.mxu0 0.0
    %879 = vmatprep.subr.mxu0 0.0
    %880 = vmatpush1.msra.mxu0 0.0
    %881 = vmatprep.subr.mxu0 0.0
    %882 = vmatpush1.msra.mxu0 0.0
    %883 = vmatprep.subr.mxu0 0.0
    %884 = vmatpush1.msra.mxu0 0.0
    %885 = vmatprep.mubr.f32.mxu0 0.0
    %886 = vmatmul.mubr.f32.gmra.mrb[0].mxu0 %v303
    %v887 = vpop.f32.mrb[0].mxu0
    %v888 = vadd.f32 0.0, %v887
    %v889 = vpop.f32.mrb[0].mxu0
    %890 = vdwg.mxu0
    %s891 = scalar_lea.vmem %s0, 96
    %v892 = vld [vmem:[%s891] sm:$0xff]
    %v893 = vld [vmem:[%s891 + $0x8] sm:$0xff]
    %v894 = vld [vmem:[%s891 + $0x10] sm:$0xff]
    %v895 = vld [vmem:[%s891 + $0x18] sm:$0xff]
    %896 = vmatprep.subr.mxu0 0.0
    %897 = vmatpush1.msra.mxu0 %v892
    %898 = vmatprep.subr.mxu0 0.0
    %899 = vmatpush1.msra.mxu0 %v893
    %900 = vmatprep.subr.mxu0 0.0
    %901 = vmatpush1.msra.mxu0 %v894
    %902 = vmatprep.subr.mxu0 0.0
    %903 = vmatpush1.msra.mxu0 %v895
    %904 = vmatprep.subr.mxu0 0.0
    %905 = vmatpush1.msra.mxu0 0.0
    %906 = vmatprep.subr.mxu0 0.0
    %907 = vmatpush1.msra.mxu0 0.0
    %908 = vmatprep.subr.mxu0 0.0
    %909 = vmatpush1.msra.mxu0 0.0
    %910 = vmatprep.subr.mxu0 0.0
    %911 = vmatpush1.msra.mxu0 0.0
    %912 = vmatprep.subr.mxu0 0.0
    %913 = vmatpush1.msra.mxu0 0.0
    %914 = vmatprep.subr.mxu0 0.0
    %915 = vmatpush1.msra.mxu0 0.0
    %916 = vmatprep.subr.mxu0 0.0
    %917 = vmatpush1.msra.mxu0 0.0
    %918 = vmatprep.subr.mxu0 0.0
    %919 = vmatpush1.msra.mxu0 0.0
    %920 = vmatprep.subr.mxu0 0.0
    %921 = vmatpush1.msra.mxu0 0.0
    %922 = vmatprep.subr.mxu0 0.0
    %923 = vmatpush1.msra.mxu0 0.0
    %924 = vmatprep.subr.mxu0 0.0
    %925 = vmatpush1.msra.mxu0 0.0
    %926 = vmatprep.subr.mxu0 0.0
    %927 = vmatpush1.msra.mxu0 0.0
    %928 = vmatprep.subr.mxu0 0.0
    %929 = vmatpush1.msra.mxu0 0.0
    %930 = vmatprep.subr.mxu0 0.0
    %931 = vmatpush1.msra.mxu0 0.0
    %932 = vmatprep.subr.mxu0 0.0
    %933 = vmatpush1.msra.mxu0 0.0
    %934 = vmatprep.subr.mxu0 0.0
    %935 = vmatpush1.msra.mxu0 0.0
    %936 = vmatprep.subr.mxu0 0.0
    %937 = vmatpush1.msra.mxu0 0.0
    %938 = vmatprep.subr.mxu0 0.0
    %939 = vmatpush1.msra.mxu0 0.0
    %940 = vmatprep.subr.mxu0 0.0
    %941 = vmatpush1.msra.mxu0 0.0
    %942 = vmatprep.subr.mxu0 0.0
    %943 = vmatpush1.msra.mxu0 0.0
    %944 = vmatprep.subr.mxu0 0.0
    %945 = vmatpush1.msra.mxu0 0.0
    %946 = vmatprep.subr.mxu0 0.0
    %947 = vmatpush1.msra.mxu0 0.0
    %948 = vmatprep.subr.mxu0 0.0
    %949 = vmatpush1.msra.mxu0 0.0
    %950 = vmatprep.subr.mxu0 0.0
    %951 = vmatpush1.msra.mxu0 0.0
    %952 = vmatprep.subr.mxu0 0.0
    %953 = vmatpush1.msra.mxu0 0.0
    %954 = vmatprep.subr.mxu0 0.0
    %955 = vmatpush1.msra.mxu0 0.0
    %956 = vmatprep.subr.mxu0 0.0
    %957 = vmatpush1.msra.mxu0 0.0
    %958 = vmatprep.subr.mxu0 0.0
    %959 = vmatpush1.msra.mxu0 0.0
    %960 = vmatprep.mubr.f32.mxu0 0.0
    %961 = vmatmul.mubr.f32.gmra.mrb[0].mxu0 %v87
    %v962 = vpop.f32.mrb[0].mxu0
    %v963 = vadd.f32 %v48, %v962
    %v964 = vpop.f32.mrb[0].mxu0
    %965 = vmatprep.mubr.f32.mxu0 0.0
    %966 = vmatmul.mubr.f32.gmra.mrb[0].mxu0 %v90
    %v967 = vpop.f32.mrb[0].mxu0
    %v968 = vadd.f32 %v53, %v967
    %v969 = vpop.f32.mrb[0].mxu0
    %970 = vmatprep.mubr.f32.mxu0 0.0
    %971 = vmatmul.mubr.f32.gmra.mrb[0].mxu0 %v93
    %v972 = vpop.f32.mrb[0].mxu0
    %v973 = vadd.f32 %v58, %v972
    %v974 = vpop.f32.mrb[0].mxu0
    %975 = vmatprep.mubr.f32.mxu0 0.0
    %976 = vmatmul.mubr.f32.gmra.mrb[0].mxu0 %v96
    %v977 = vpop.f32.mrb[0].mxu0
    %v978 = vadd.f32 %v63, %v977
    %v979 = vpop.f32.mrb[0].mxu0
    %980 = vmatprep.mubr.f32.mxu0 0.0
    %981 = vmatmul.mubr.f32.gmra.mrb[0].mxu0 %v99
    %v982 = vpop.f32.mrb[0].mxu0
    %v983 = vadd.f32 %v68, %v982
    %v984 = vpop.f32.mrb[0].mxu0
    %985 = vmatprep.mubr.f32.mxu0 0.0
    %986 = vmatmul.mubr.f32.gmra.mrb[0].mxu0 %v102
    %v987 = vpop.f32.mrb[0].mxu0
    %v988 = vadd.f32 %v73, %v987
    %v989 = vpop.f32.mrb[0].mxu0
    %990 = vmatprep.mubr.f32.mxu0 0.0
    %991 = vmatmul.mubr.f32.gmra.mrb[0].mxu0 %v105
    %v992 = vpop.f32.mrb[0].mxu0
    %v993 = vadd.f32 %v78, %v992
    %v994 = vpop.f32.mrb[0].mxu0
    %995 = vmatprep.mubr.f32.mxu0 0.0
    %996 = vmatmul.mubr.f32.gmra.mrb[0].mxu0 %v108
    %v997 = vpop.f32.mrb[0].mxu0
    %v998 = vadd.f32 %v83, %v997
    %v999 = vpop.f32.mrb[0].mxu0
    %1000 = vdwg.mxu0
    %v1001 = vtanh.pop %v963
    %v1002 = vtanh.pop %v968
    %v1003 = vtanh.pop %v973
    %v1004 = vtanh.pop %v978
    %v1005 = vtanh.pop %v983
    %v1006 = vtanh.pop %v988
    %v1007 = vtanh.pop %v993
    %v1008 = vtanh.pop %v998
    %1009 = vmatprep.subr.mxu0 0.0
    %1010 = vmatpush1.msra.mxu0 %v1001
    %1011 = vmatprep.subr.mxu0 0.0
    %1012 = vmatpush1.msra.mxu0 %v1002
    %1013 = vmatprep.subr.mxu0 0.0
    %1014 = vmatpush1.msra.mxu0 %v1003
    %1015 = vmatprep.subr.mxu0 0.0
    %1016 = vmatpush1.msra.mxu0 %v1004
    %1017 = vmatprep.subr.mxu0 0.0
    %1018 = vmatpush1.msra.mxu0 %v1005
    %1019 = vmatprep.subr.mxu0 0.0
    %1020 = vmatpush1.msra.mxu0 %v1006
    %1021 = vmatprep.subr.mxu0 0.0
    %1022 = vmatpush1.msra.mxu0 %v1007
    %1023 = vmatprep.subr.mxu0 0.0
    %1024 = vmatpush1.msra.mxu0 %v1008
    %1025 = vmatprep.subr.mxu0 0.0
    %1026 = vmatpush1.msra.mxu0 0.0
    %1027 = vmatprep.subr.mxu0 0.0
    %1028 = vmatpush1.msra.mxu0 0.0
    %1029 = vmatprep.subr.mxu0 0.0
    %1030 = vmatpush1.msra.mxu0 0.0
    %1031 = vmatprep.subr.mxu0 0.0
    %1032 = vmatpush1.msra.mxu0 0.0
    %1033 = vmatprep.subr.mxu0 0.0
    %1034 = vmatpush1.msra.mxu0 0.0
    %1035 = vmatprep.subr.mxu0 0.0
    %1036 = vmatpush1.msra.mxu0 0.0
    %1037 = vmatprep.subr.mxu0 0.0
    %1038 = vmatpush1.msra.mxu0 0.0
    %1039 = vmatprep.subr.mxu0 0.0
    %1040 = vmatpush1.msra.mxu0 0.0
    %1041 = vmatprep.subr.mxu0 0.0
    %1042 = vmatpush1.msra.mxu0 0.0
    %1043 = vmatprep.subr.mxu0 0.0
    %1044 = vmatpush1.msra.mxu0 0.0
    %1045 = vmatprep.subr.mxu0 0.0
    %1046 = vmatpush1.msra.mxu0 0.0
    %1047 = vmatprep.subr.mxu0 0.0
    %1048 = vmatpush1.msra.mxu0 0.0
    %1049 = vmatprep.subr.mxu0 0.0
    %1050 = vmatpush1.msra.mxu0 0.0
    %1051 = vmatprep.subr.mxu0 0.0
    %1052 = vmatpush1.msra.mxu0 0.0
    %1053 = vmatprep.subr.mxu0 0.0
    %1054 = vmatpush1.msra.mxu0 0.0
    %1055 = vmatprep.subr.mxu0 0.0
    %1056 = vmatpush1.msra.mxu0 0.0
    %1057 = vmatprep.subr.mxu0 0.0
    %1058 = vmatpush1.msra.mxu0 0.0
    %1059 = vmatprep.subr.mxu0 0.0
    %1060 = vmatpush1.msra.mxu0 0.0
    %1061 = vmatprep.subr.mxu0 0.0
    %1062 = vmatpush1.msra.mxu0 0.0
    %1063 = vmatprep.subr.mxu0 0.0
    %1064 = vmatpush1.msra.mxu0 0.0
    %1065 = vmatprep.subr.mxu0 0.0
    %1066 = vmatpush1.msra.mxu0 0.0
    %1067 = vmatprep.subr.mxu0 0.0
    %1068 = vmatpush1.msra.mxu0 0.0
    %1069 = vmatprep.subr.mxu0 0.0
    %1070 = vmatpush1.msra.mxu0 0.0
    %1071 = vmatprep.subr.mxu0 0.0
    %1072 = vmatpush1.msra.mxu0 0.0
    %1073 = vmatprep.mubr.f32.mxu0 0.0
    %1074 = vmatmul.mubr.f32.gmra.mrb[0].mxu0 %v230
    %v1075 = vpop.f32.mrb[0].mxu0
    %v1076 = vadd.f32 %v226, %v1075
    %v1077 = vpop.f32.mrb[0].mxu0
    %1078 = vdwg.mxu0
    %1079 = vmatprep.subr.mxu0 0.0
    %1080 = vmatpush1.msra.mxu0 %v892
    %1081 = vmatprep.subr.mxu0 0.0
    %1082 = vmatpush1.msra.mxu0 %v893
    %1083 = vmatprep.subr.mxu0 0.0
    %1084 = vmatpush1.msra.mxu0 %v894
    %1085 = vmatprep.subr.mxu0 0.0
    %1086 = vmatpush1.msra.mxu0 %v895
    %1087 = vmatprep.subr.mxu0 0.0
    %1088 = vmatpush1.msra.mxu0 0.0
    %1089 = vmatprep.subr.mxu0 0.0
    %1090 = vmatpush1.msra.mxu0 0.0
    %1091 = vmatprep.subr.mxu0 0.0
    %1092 = vmatpush1.msra.mxu0 0.0
    %1093 = vmatprep.subr.mxu0 0.0
    %1094 = vmatpush1.msra.mxu0 0.0
    %1095 = vmatprep.subr.mxu0 0.0
    %1096 = vmatpush1.msra.mxu0 0.0
    %1097 = vmatprep.subr.mxu0 0.0
    %1098 = vmatpush1.msra.mxu0 0.0
    %1099 = vmatprep.subr.mxu0 0.0
    %1100 = vmatpush1.msra.mxu0 0.0
    %1101 = vmatprep.subr.mxu0 0.0
    %1102 = vmatpush1.msra.mxu0 0.0
    %1103 = vmatprep.subr.mxu0 0.0
    %1104 = vmatpush1.msra.mxu0 0.0
    %1105 = vmatprep.subr.mxu0 0.0
    %1106 = vmatpush1.msra.mxu0 0.0
    %1107 = vmatprep.subr.mxu0 0.0
    %1108 = vmatpush1.msra.mxu0 0.0
    %1109 = vmatprep.subr.mxu0 0.0
    %1110 = vmatpush1.msra.mxu0 0.0
    %1111 = vmatprep.subr.mxu0 0.0
    %1112 = vmatpush1.msra.mxu0 0.0
    %1113 = vmatprep.subr.mxu0 0.0
    %1114 = vmatpush1.msra.mxu0 0.0
    %1115 = vmatprep.subr.mxu0 0.0
    %1116 = vmatpush1.msra.mxu0 0.0
    %1117 = vmatprep.subr.mxu0 0.0
    %1118 = vmatpush1.msra.mxu0 0.0
    %1119 = vmatprep.subr.mxu0 0.0
    %1120 = vmatpush1.msra.mxu0 0.0
    %1121 = vmatprep.subr.mxu0 0.0
    %1122 = vmatpush1.msra.mxu0 0.0
    %1123 = vmatprep.subr.mxu0 0.0
    %1124 = vmatpush1.msra.mxu0 0.0
    %1125 = vmatprep.subr.mxu0 0.0
    %1126 = vmatpush1.msra.mxu0 0.0
    %1127 = vmatprep.subr.mxu0 0.0
    %1128 = vmatpush1.msra.mxu0 0.0
    %1129 = vmatprep.subr.mxu0 0.0
    %1130 = vmatpush1.msra.mxu0 0.0
    %1131 = vmatprep.subr.mxu0 0.0
    %1132 = vmatpush1.msra.mxu0 0.0
    %1133 = vmatprep.subr.mxu0 0.0
    %1134 = vmatpush1.msra.mxu0 0.0
    %1135 = vmatprep.subr.mxu0 0.0
    %1136 = vmatpush1.msra.mxu0 0.0
    %1137 = vmatprep.subr.mxu0 0.0
    %1138 = vmatpush1.msra.mxu0 0.0
    %1139 = vmatprep.subr.mxu0 0.0
    %1140 = vmatpush1.msra.mxu0 0.0
    %1141 = vmatprep.subr.mxu0 0.0
    %1142 = vmatpush1.msra.mxu0 0.0
    %1143 = vmatprep.mubr.f32.mxu0 0.0
    %1144 = vmatmul.mubr.f32.gmra.mrb[0].mxu0 %v303
    %v1145 = vpop.f32.mrb[0].mxu0
    %v1146 = vadd.f32 0.0, %v1145
    %v1147 = vpop.f32.mrb[0].mxu0
    %1148 = vdwg.mxu0
    %s1149 = scalar_lea.vmem %s0, 128
    %v1150 = vld [vmem:[%s1149] sm:$0xff]
    %v1151 = vld [vmem:[%s1149 + $0x8] sm:$0xff]
    %v1152 = vld [vmem:[%s1149 + $0x10] sm:$0xff]
    %v1153 = vld [vmem:[%s1149 + $0x18] sm:$0xff]
    %1154 = vmatprep.subr.mxu0 0.0
    %1155 = vmatpush1.msra.mxu0 %v1150
    %1156 = vmatprep.subr.mxu0 0.0
    %1157 = vmatpush1.msra.mxu0 %v1151
    %1158 = vmatprep.subr.mxu0 0.0
    %1159 = vmatpush1.msra.mxu0 %v1152
    %1160 = vmatprep.subr.mxu0 0.0
    %1161 = vmatpush1.msra.mxu0 %v1153
    %1162 = vmatprep.subr.mxu0 0.0
    %1163 = vmatpush1.msra.mxu0 0.0
    %1164 = vmatprep.subr.mxu0 0.0
    %1165 = vmatpush1.msra.mxu0 0.0
    %1166 = vmatprep.subr.mxu0 0.0
    %1167 = vmatpush1.msra.mxu0 0.0
    %1168 = vmatprep.subr.mxu0 0.0
    %1169 = vmatpush1.msra.mxu0 0.0
    %1170 = vmatprep.subr.mxu0 0.0
    %1171 = vmatpush1.msra.mxu0 0.0
    %1172 = vmatprep.subr.mxu0 0.0
    %1173 = vmatpush1.msra.mxu0 0.0
    %1174 = vmatprep.subr.mxu0 0.0
    %1175 = vmatpush1.msra.mxu0 0.0
    %1176 = vmatprep.subr.mxu0 0.0
    %1177 = vmatpush1.msra.mxu0 0.0
    %1178 = vmatprep.subr.mxu0 0.0
    %1179 = vmatpush1.msra.mxu0 0.0
    %1180 = vmatprep.subr.mxu0 0.0
    %1181 = vmatpush1.msra.mxu0 0.0
    %1182 = vmatprep.subr.mxu0 0.0
    %1183 = vmatpush1.msra.mxu0 0.0
    %1184 = vmatprep.subr.mxu0 0.0
    %1185 = vmatpush1.msra.mxu0 0.0
    %1186 = vmatprep.subr.mxu0 0.0
    %1187 = vmatpush1.msra.mxu0 0.0
    %1188 = vmatprep.subr.mxu0 0.0
    %1189 = vmatpush1.msra.mxu0 0.0
    %1190 = vmatprep.subr.mxu0 0.0
    %1191 = vmatpush1.msra.mxu0 0.0
    %1192 = vmatprep.subr.mxu0 0.0
    %1193 = vmatpush1.msra.mxu0 0.0
    %1194 = vmatprep.subr.mxu0 0.0
    %1195 = vmatpush1.msra.mxu0 0.0
    %1196 = vmatprep.subr.mxu0 0.0
    %1197 = vmatpush1.msra.mxu0 0.0
    %1198 = vmatprep.subr.mxu0 0.0
    %1199 = vmatpush1.msra.mxu0 0.0
    %1200 = vmatprep.subr.mxu0 0.0
    %1201 = vmatpush1.msra.mxu0 0.0
    %1202 = vmatprep.subr.mxu0 0.0
    %1203 = vmatpush1.msra.mxu0 0.0
    %1204 = vmatprep.subr.mxu0 0.0
    %1205 = vmatpush1.msra.mxu0 0.0
    %1206 = vmatprep.subr.mxu0 0.0
    %1207 = vmatpush1.msra.mxu0 0.0
    %1208 = vmatprep.subr.mxu0 0.0
    %1209 = vmatpush1.msra.mxu0 0.0
    %1210 = vmatprep.subr.mxu0 0.0
    %1211 = vmatpush1.msra.mxu0 0.0
    %1212 = vmatprep.subr.mxu0 0.0
    %1213 = vmatpush1.msra.mxu0 0.0
    %1214 = vmatprep.subr.mxu0 0.0
    %1215 = vmatpush1.msra.mxu0 0.0
    %1216 = vmatprep.subr.mxu0 0.0
    %1217 = vmatpush1.msra.mxu0 0.0
    %1218 = vmatprep.mubr.f32.mxu0 0.0
    %1219 = vmatmul.mubr.f32.gmra.mrb[0].mxu0 %v87
    %v1220 = vpop.f32.mrb[0].mxu0
    %v1221 = vadd.f32 %v48, %v1220
    %v1222 = vpop.f32.mrb[0].mxu0
    %1223 = vmatprep.mubr.f32.mxu0 0.0
    %1224 = vmatmul.mubr.f32.gmra.mrb[0].mxu0 %v90
    %v1225 = vpop.f32.mrb[0].mxu0
    %v1226 = vadd.f32 %v53, %v1225
    %v1227 = vpop.f32.mrb[0].mxu0
    %1228 = vmatprep.mubr.f32.mxu0 0.0
    %1229 = vmatmul.mubr.f32.gmra.mrb[0].mxu0 %v93
    %v1230 = vpop.f32.mrb[0].mxu0
    %v1231 = vadd.f32 %v58, %v1230
    %v1232 = vpop.f32.mrb[0].mxu0
    %1233 = vmatprep.mubr.f32.mxu0 0.0
    %1234 = vmatmul.mubr.f32.gmra.mrb[0].mxu0 %v96
    %v1235 = vpop.f32.mrb[0].mxu0
    %v1236 = vadd.f32 %v63, %v1235
    %v1237 = vpop.f32.mrb[0].mxu0
    %1238 = vmatprep.mubr.f32.mxu0 0.0
    %1239 = vmatmul.mubr.f32.gmra.mrb[0].mxu0 %v99
    %v1240 = vpop.f32.mrb[0].mxu0
    %v1241 = vadd.f32 %v68, %v1240
    %v1242 = vpop.f32.mrb[0].mxu0
    %1243 = vmatprep.mubr.f32.mxu0 0.0
    %1244 = vmatmul.mubr.f32.gmra.mrb[0].mxu0 %v102
    %v1245 = vpop.f32.mrb[0].mxu0
    %v1246 = vadd.f32 %v73, %v1245
    %v1247 = vpop.f32.mrb[0].mxu0
    %1248 = vmatprep.mubr.f32.mxu0 0.0
    %1249 = vmatmul.mubr.f32.gmra.mrb[0].mxu0 %v105
    %v1250 = vpop.f32.mrb[0].mxu0
    %v1251 = vadd.f32 %v78, %v1250
    %v1252 = vpop.f32.mrb[0].mxu0
    %1253 = vmatprep.mubr.f32.mxu0 0.0
    %1254 = vmatmul.mubr.f32.gmra.mrb[0].mxu0 %v108
    %v1255 = vpop.f32.mrb[0].mxu0
    %v1256 = vadd.f32 %v83, %v1255
    %v1257 = vpop.f32.mrb[0].mxu0
    %1258 = vdwg.mxu0
    %v1259 = vtanh.pop %v1221
    %v1260 = vtanh.pop %v1226
    %v1261 = vtanh.pop %v1231
    %v1262 = vtanh.pop %v1236
    %v1263 = vtanh.pop %v1241
    %v1264 = vtanh.pop %v1246
    %v1265 = vtanh.pop %v1251
    %v1266 = vtanh.pop %v1256
    %1267 = vmatprep.subr.mxu0 0.0
    %1268 = vmatpush1.msra.mxu0 %v1259
    %1269 = vmatprep.subr.mxu0 0.0
    %1270 = vmatpush1.msra.mxu0 %v1260
    %1271 = vmatprep.subr.mxu0 0.0
    %1272 = vmatpush1.msra.mxu0 %v1261
    %1273 = vmatprep.subr.mxu0 0.0
    %1274 = vmatpush1.msra.mxu0 %v1262
    %1275 = vmatprep.subr.mxu0 0.0
    %1276 = vmatpush1.msra.mxu0 %v1263
    %1277 = vmatprep.subr.mxu0 0.0
    %1278 = vmatpush1.msra.mxu0 %v1264
    %1279 = vmatprep.subr.mxu0 0.0
    %1280 = vmatpush1.msra.mxu0 %v1265
    %1281 = vmatprep.subr.mxu0 0.0
    %1282 = vmatpush1.msra.mxu0 %v1266
    %1283 = vmatprep.subr.mxu0 0.0
    %1284 = vmatpush1.msra.mxu0 0.0
    %1285 = vmatprep.subr.mxu0 0.0
    %1286 = vmatpush1.msra.mxu0 0.0
    %1287 = vmatprep.subr.mxu0 0.0
    %1288 = vmatpush1.msra.mxu0 0.0
    %1289 = vmatprep.subr.mxu0 0.0
    %1290 = vmatpush1.msra.mxu0 0.0
    %1291 = vmatprep.subr.mxu0 0.0
    %1292 = vmatpush1.msra.mxu0 0.0
    %1293 = vmatprep.subr.mxu0 0.0
    %1294 = vmatpush1.msra.mxu0 0.0
    %1295 = vmatprep.subr.mxu0 0.0
    %1296 = vmatpush1.msra.mxu0 0.0
    %1297 = vmatprep.subr.mxu0 0.0
    %1298 = vmatpush1.msra.mxu0 0.0
    %1299 = vmatprep.subr.mxu0 0.0
    %1300 = vmatpush1.msra.mxu0 0.0
    %1301 = vmatprep.subr.mxu0 0.0
    %1302 = vmatpush1.msra.mxu0 0.0
    %1303 = vmatprep.subr.mxu0 0.0
    %1304 = vmatpush1.msra.mxu0 0.0
    %1305 = vmatprep.subr.mxu0 0.0
    %1306 = vmatpush1.msra.mxu0 0.0
    %1307 = vmatprep.subr.mxu0 0.0
    %1308 = vmatpush1.msra.mxu0 0.0
    %1309 = vmatprep.subr.mxu0 0.0
    %1310 = vmatpush1.msra.mxu0 0.0
    %1311 = vmatprep.subr.mxu0 0.0
    %1312 = vmatpush1.msra.mxu0 0.0
    %1313 = vmatprep.subr.mxu0 0.0
    %1314 = vmatpush1.msra.mxu0 0.0
    %1315 = vmatprep.subr.mxu0 0.0
    %1316 = vmatpush1.msra.mxu0 0.0
    %1317 = vmatprep.subr.mxu0 0.0
    %1318 = vmatpush1.msra.mxu0 0.0
    %1319 = vmatprep.subr.mxu0 0.0
    %1320 = vmatpush1.msra.mxu0 0.0
    %1321 = vmatprep.subr.mxu0 0.0
    %1322 = vmatpush1.msra.mxu0 0.0
    %1323 = vmatprep.subr.mxu0 0.0
    %1324 = vmatpush1.msra.mxu0 0.0
    %1325 = vmatprep.subr.mxu0 0.0
    %1326 = vmatpush1.msra.mxu0 0.0
    %1327 = vmatprep.subr.mxu0 0.0
    %1328 = vmatpush1.msra.mxu0 0.0
    %1329 = vmatprep.subr.mxu0 0.0
    %1330 = vmatpush1.msra.mxu0 0.0
    %1331 = vmatprep.mubr.f32.mxu0 0.0
    %1332 = vmatmul.mubr.f32.gmra.mrb[0].mxu0 %v230
    %v1333 = vpop.f32.mrb[0].mxu0
    %v1334 = vadd.f32 %v226, %v1333
    %v1335 = vpop.f32.mrb[0].mxu0
    %1336 = vdwg.mxu0
    %1337 = vmatprep.subr.mxu0 0.0
    %1338 = vmatpush1.msra.mxu0 %v1150
    %1339 = vmatprep.subr.mxu0 0.0
    %1340 = vmatpush1.msra.mxu0 %v1151
    %1341 = vmatprep.subr.mxu0 0.0
    %1342 = vmatpush1.msra.mxu0 %v1152
    %1343 = vmatprep.subr.mxu0 0.0
    %1344 = vmatpush1.msra.mxu0 %v1153
    %1345 = vmatprep.subr.mxu0 0.0
    %1346 = vmatpush1.msra.mxu0 0.0
    %1347 = vmatprep.subr.mxu0 0.0
    %1348 = vmatpush1.msra.mxu0 0.0
    %1349 = vmatprep.subr.mxu0 0.0
    %1350 = vmatpush1.msra.mxu0 0.0
    %1351 = vmatprep.subr.mxu0 0.0
    %1352 = vmatpush1.msra.mxu0 0.0
    %1353 = vmatprep.subr.mxu0 0.0
    %1354 = vmatpush1.msra.mxu0 0.0
    %1355 = vmatprep.subr.mxu0 0.0
    %1356 = vmatpush1.msra.mxu0 0.0
    %1357 = vmatprep.subr.mxu0 0.0
    %1358 = vmatpush1.msra.mxu0 0.0
    %1359 = vmatprep.subr.mxu0 0.0
    %1360 = vmatpush1.msra.mxu0 0.0
    %1361 = vmatprep.subr.mxu0 0.0
    %1362 = vmatpush1.msra.mxu0 0.0
    %1363 = vmatprep.subr.mxu0 0.0
    %1364 = vmatpush1.msra.mxu0 0.0
    %1365 = vmatprep.subr.mxu0 0.0
    %1366 = vmatpush1.msra.mxu0 0.0
    %1367 = vmatprep.subr.mxu0 0.0
    %1368 = vmatpush1.msra.mxu0 0.0
    %1369 = vmatprep.subr.mxu0 0.0
    %1370 = vmatpush1.msra.mxu0 0.0
    %1371 = vmatprep.subr.mxu0 0.0
    %1372 = vmatpush1.msra.mxu0 0.0
    %1373 = vmatprep.subr.mxu0 0.0
    %1374 = vmatpush1.msra.mxu0 0.0
    %1375 = vmatprep.subr.mxu0 0.0
    %1376 = vmatpush1.msra.mxu0 0.0
    %1377 = vmatprep.subr.mxu0 0.0
    %1378 = vmatpush1.msra.mxu0 0.0
    %1379 = vmatprep.subr.mxu0 0.0
    %1380 = vmatpush1.msra.mxu0 0.0
    %1381 = vmatprep.subr.mxu0 0.0
    %1382 = vmatpush1.msra.mxu0 0.0
    %1383 = vmatprep.subr.mxu0 0.0
    %1384 = vmatpush1.msra.mxu0 0.0
    %1385 = vmatprep.subr.mxu0 0.0
    %1386 = vmatpush1.msra.mxu0 0.0
    %1387 = vmatprep.subr.mxu0 0.0
    %1388 = vmatpush1.msra.mxu0 0.0
    %1389 = vmatprep.subr.mxu0 0.0
    %1390 = vmatpush1.msra.mxu0 0.0
    %1391 = vmatprep.subr.mxu0 0.0
    %1392 = vmatpush1.msra.mxu0 0.0
    %1393 = vmatprep.subr.mxu0 0.0
    %1394 = vmatpush1.msra.mxu0 0.0
    %1395 = vmatprep.subr.mxu0 0.0
    %1396 = vmatpush1.msra.mxu0 0.0
    %1397 = vmatprep.subr.mxu0 0.0
    %1398 = vmatpush1.msra.mxu0 0.0
    %1399 = vmatprep.subr.mxu0 0.0
    %1400 = vmatpush1.msra.mxu0 0.0
    %1401 = vmatprep.mubr.f32.mxu0 0.0
    %1402 = vmatmul.mubr.f32.gmra.mrb[0].mxu0 %v303
    %v1403 = vpop.f32.mrb[0].mxu0
    %v1404 = vadd.f32 0.0, %v1403
    %v1405 = vpop.f32.mrb[0].mxu0
    %1406 = vdwg.mxu0
    %s1407 = scalar_lea.vmem %s0, 160
    %v1408 = vld [vmem:[%s1407] sm:$0xff]
    %v1409 = vld [vmem:[%s1407 + $0x8] sm:$0xff]
    %v1410 = vld [vmem:[%s1407 + $0x10] sm:$0xff]
    %v1411 = vld [vmem:[%s1407 + $0x18] sm:$0xff]
    %1412 = vmatprep.subr.mxu0 0.0
    %1413 = vmatpush1.msra.mxu0 %v1408
    %1414 = vmatprep.subr.mxu0 0.0
    %1415 = vmatpush1.msra.mxu0 %v1409
    %1416 = vmatprep.subr.mxu0 0.0
    %1417 = vmatpush1.msra.mxu0 %v1410
    %1418 = vmatprep.subr.mxu0 0.0
    %1419 = vmatpush1.msra.mxu0 %v1411
    %1420 = vmatprep.subr.mxu0 0.0
    %1421 = vmatpush1.msra.mxu0 0.0
    %1422 = vmatprep.subr.mxu0 0.0
    %1423 = vmatpush1.msra.mxu0 0.0
    %1424 = vmatprep.subr.mxu0 0.0
    %1425 = vmatpush1.msra.mxu0 0.0
    %1426 = vmatprep.subr.mxu0 0.0
    %1427 = vmatpush1.msra.mxu0 0.0
    %1428 = vmatprep.subr.mxu0 0.0
    %1429 = vmatpush1.msra.mxu0 0.0
    %1430 = vmatprep.subr.mxu0 0.0
    %1431 = vmatpush1.msra.mxu0 0.0
    %1432 = vmatprep.subr.mxu0 0.0
    %1433 = vmatpush1.msra.mxu0 0.0
    %1434 = vmatprep.subr.mxu0 0.0
    %1435 = vmatpush1.msra.mxu0 0.0
    %1436 = vmatprep.subr.mxu0 0.0
    %1437 = vmatpush1.msra.mxu0 0.0
    %1438 = vmatprep.subr.mxu0 0.0
    %1439 = vmatpush1.msra.mxu0 0.0
    %1440 = vmatprep.subr.mxu0 0.0
    %1441 = vmatpush1.msra.mxu0 0.0
    %1442 = vmatprep.subr.mxu0 0.0
    %1443 = vmatpush1.msra.mxu0 0.0
    %1444 = vmatprep.subr.mxu0 0.0
    %1445 = vmatpush1.msra.mxu0 0.0
    %1446 = vmatprep.subr.mxu0 0.0
    %1447 = vmatpush1.msra.mxu0 0.0
    %1448 = vmatprep.subr.mxu0 0.0
    %1449 = vmatpush1.msra.mxu0 0.0
    %1450 = vmatprep.subr.mxu0 0.0
    %1451 = vmatpush1.msra.mxu0 0.0
    %1452 = vmatprep.subr.mxu0 0.0
    %1453 = vmatpush1.msra.mxu0 0.0
    %1454 = vmatprep.subr.mxu0 0.0
    %1455 = vmatpush1.msra.mxu0 0.0
    %1456 = vmatprep.subr.mxu0 0.0
    %1457 = vmatpush1.msra.mxu0 0.0
    %1458 = vmatprep.subr.mxu0 0.0
    %1459 = vmatpush1.msra.mxu0 0.0
    %1460 = vmatprep.subr.mxu0 0.0
    %1461 = vmatpush1.msra.mxu0 0.0
    %1462 = vmatprep.subr.mxu0 0.0
    %1463 = vmatpush1.msra.mxu0 0.0
    %1464 = vmatprep.subr.mxu0 0.0
    %1465 = vmatpush1.msra.mxu0 0.0
    %1466 = vmatprep.subr.mxu0 0.0
    %1467 = vmatpush1.msra.mxu0 0.0
    %1468 = vmatprep.subr.mxu0 0.0
    %1469 = vmatpush1.msra.mxu0 0.0
    %1470 = vmatprep.subr.mxu0 0.0
    %1471 = vmatpush1.msra.mxu0 0.0
    %1472 = vmatprep.subr.mxu0 0.0
    %1473 = vmatpush1.msra.mxu0 0.0
    %1474 = vmatprep.subr.mxu0 0.0
    %1475 = vmatpush1.msra.mxu0 0.0
    %1476 = vmatprep.mubr.f32.mxu0 0.0
    %1477 = vmatmul.mubr.f32.gmra.mrb[0].mxu0 %v87
    %v1478 = vpop.f32.mrb[0].mxu0
    %v1479 = vadd.f32 %v48, %v1478
    %v1480 = vpop.f32.mrb[0].mxu0
    %1481 = vmatprep.mubr.f32.mxu0 0.0
    %1482 = vmatmul.mubr.f32.gmra.mrb[0].mxu0 %v90
    %v1483 = vpop.f32.mrb[0].mxu0
    %v1484 = vadd.f32 %v53, %v1483
    %v1485 = vpop.f32.mrb[0].mxu0
    %1486 = vmatprep.mubr.f32.mxu0 0.0
    %1487 = vmatmul.mubr.f32.gmra.mrb[0].mxu0 %v93
    %v1488 = vpop.f32.mrb[0].mxu0
    %v1489 = vadd.f32 %v58, %v1488
    %v1490 = vpop.f32.mrb[0].mxu0
    %1491 = vmatprep.mubr.f32.mxu0 0.0
    %1492 = vmatmul.mubr.f32.gmra.mrb[0].mxu0 %v96
    %v1493 = vpop.f32.mrb[0].mxu0
    %v1494 = vadd.f32 %v63, %v1493
    %v1495 = vpop.f32.mrb[0].mxu0
    %1496 = vmatprep.mubr.f32.mxu0 0.0
    %1497 = vmatmul.mubr.f32.gmra.mrb[0].mxu0 %v99
    %v1498 = vpop.f32.mrb[0].mxu0
    %v1499 = vadd.f32 %v68, %v1498
    %v1500 = vpop.f32.mrb[0].mxu0
    %1501 = vmatprep.mubr.f32.mxu0 0.0
    %1502 = vmatmul.mubr.f32.gmra.mrb[0].mxu0 %v102
    %v1503 = vpop.f32.mrb[0].mxu0
    %v1504 = vadd.f32 %v73, %v1503
    %v1505 = vpop.f32.mrb[0].mxu0
    %1506 = vmatprep.mubr.f32.mxu0 0.0
    %1507 = vmatmul.mubr.f32.gmra.mrb[0].mxu0 %v105
    %v1508 = vpop.f32.mrb[0].mxu0
    %v1509 = vadd.f32 %v78, %v1508
    %v1510 = vpop.f32.mrb[0].mxu0
    %1511 = vmatprep.mubr.f32.mxu0 0.0
    %1512 = vmatmul.mubr.f32.gmra.mrb[0].mxu0 %v108
    %v1513 = vpop.f32.mrb[0].mxu0
    %v1514 = vadd.f32 %v83, %v1513
    %v1515 = vpop.f32.mrb[0].mxu0
    %1516 = vdwg.mxu0
    %v1517 = vtanh.pop %v1479
    %v1518 = vtanh.pop %v1484
    %v1519 = vtanh.pop %v1489
    %v1520 = vtanh.pop %v1494
    %v1521 = vtanh.pop %v1499
    %v1522 = vtanh.pop %v1504
    %v1523 = vtanh.pop %v1509
    %v1524 = vtanh.pop %v1514
    %1525 = vmatprep.subr.mxu0 0.0
    %1526 = vmatpush1.msra.mxu0 %v1517
    %1527 = vmatprep.subr.mxu0 0.0
    %1528 = vmatpush1.msra.mxu0 %v1518
    %1529 = vmatprep.subr.mxu0 0.0
    %1530 = vmatpush1.msra.mxu0 %v1519
    %1531 = vmatprep.subr.mxu0 0.0
    %1532 = vmatpush1.msra.mxu0 %v1520
    %1533 = vmatprep.subr.mxu0 0.0
    %1534 = vmatpush1.msra.mxu0 %v1521
    %1535 = vmatprep.subr.mxu0 0.0
    %1536 = vmatpush1.msra.mxu0 %v1522
    %1537 = vmatprep.subr.mxu0 0.0
    %1538 = vmatpush1.msra.mxu0 %v1523
    %1539 = vmatprep.subr.mxu0 0.0
    %1540 = vmatpush1.msra.mxu0 %v1524
    %1541 = vmatprep.subr.mxu0 0.0
    %1542 = vmatpush1.msra.mxu0 0.0
    %1543 = vmatprep.subr.mxu0 0.0
    %1544 = vmatpush1.msra.mxu0 0.0
    %1545 = vmatprep.subr.mxu0 0.0
    %1546 = vmatpush1.msra.mxu0 0.0
    %1547 = vmatprep.subr.mxu0 0.0
    %1548 = vmatpush1.msra.mxu0 0.0
    %1549 = vmatprep.subr.mxu0 0.0
    %1550 = vmatpush1.msra.mxu0 0.0
    %1551 = vmatprep.subr.mxu0 0.0
    %1552 = vmatpush1.msra.mxu0 0.0
    %1553 = vmatprep.subr.mxu0 0.0
    %1554 = vmatpush1.msra.mxu0 0.0
    %1555 = vmatprep.subr.mxu0 0.0
    %1556 = vmatpush1.msra.mxu0 0.0
    %1557 = vmatprep.subr.mxu0 0.0
    %1558 = vmatpush1.msra.mxu0 0.0
    %1559 = vmatprep.subr.mxu0 0.0
    %1560 = vmatpush1.msra.mxu0 0.0
    %1561 = vmatprep.subr.mxu0 0.0
    %1562 = vmatpush1.msra.mxu0 0.0
    %1563 = vmatprep.subr.mxu0 0.0
    %1564 = vmatpush1.msra.mxu0 0.0
    %1565 = vmatprep.subr.mxu0 0.0
    %1566 = vmatpush1.msra.mxu0 0.0
    %1567 = vmatprep.subr.mxu0 0.0
    %1568 = vmatpush1.msra.mxu0 0.0
    %1569 = vmatprep.subr.mxu0 0.0
    %1570 = vmatpush1.msra.mxu0 0.0
    %1571 = vmatprep.subr.mxu0 0.0
    %1572 = vmatpush1.msra.mxu0 0.0
    %1573 = vmatprep.subr.mxu0 0.0
    %1574 = vmatpush1.msra.mxu0 0.0
    %1575 = vmatprep.subr.mxu0 0.0
    %1576 = vmatpush1.msra.mxu0 0.0
    %1577 = vmatprep.subr.mxu0 0.0
    %1578 = vmatpush1.msra.mxu0 0.0
    %1579 = vmatprep.subr.mxu0 0.0
    %1580 = vmatpush1.msra.mxu0 0.0
    %1581 = vmatprep.subr.mxu0 0.0
    %1582 = vmatpush1.msra.mxu0 0.0
    %1583 = vmatprep.subr.mxu0 0.0
    %1584 = vmatpush1.msra.mxu0 0.0
    %1585 = vmatprep.subr.mxu0 0.0
    %1586 = vmatpush1.msra.mxu0 0.0
    %1587 = vmatprep.subr.mxu0 0.0
    %1588 = vmatpush1.msra.mxu0 0.0
    %1589 = vmatprep.mubr.f32.mxu0 0.0
    %1590 = vmatmul.mubr.f32.gmra.mrb[0].mxu0 %v230
    %v1591 = vpop.f32.mrb[0].mxu0
    %v1592 = vadd.f32 %v226, %v1591
    %v1593 = vpop.f32.mrb[0].mxu0
    %1594 = vdwg.mxu0
    %1595 = vmatprep.subr.mxu0 0.0
    %1596 = vmatpush1.msra.mxu0 %v1408
    %1597 = vmatprep.subr.mxu0 0.0
    %1598 = vmatpush1.msra.mxu0 %v1409
    %1599 = vmatprep.subr.mxu0 0.0
    %1600 = vmatpush1.msra.mxu0 %v1410
    %1601 = vmatprep.subr.mxu0 0.0
    %1602 = vmatpush1.msra.mxu0 %v1411
    %1603 = vmatprep.subr.mxu0 0.0
    %1604 = vmatpush1.msra.mxu0 0.0
    %1605 = vmatprep.subr.mxu0 0.0
    %1606 = vmatpush1.msra.mxu0 0.0
    %1607 = vmatprep.subr.mxu0 0.0
    %1608 = vmatpush1.msra.mxu0 0.0
    %1609 = vmatprep.subr.mxu0 0.0
    %1610 = vmatpush1.msra.mxu0 0.0
    %1611 = vmatprep.subr.mxu0 0.0
    %1612 = vmatpush1.msra.mxu0 0.0
    %1613 = vmatprep.subr.mxu0 0.0
    %1614 = vmatpush1.msra.mxu0 0.0
    %1615 = vmatprep.subr.mxu0 0.0
    %1616 = vmatpush1.msra.mxu0 0.0
    %1617 = vmatprep.subr.mxu0 0.0
    %1618 = vmatpush1.msra.mxu0 0.0
    %1619 = vmatprep.subr.mxu0 0.0
    %1620 = vmatpush1.msra.mxu0 0.0
    %1621 = vmatprep.subr.mxu0 0.0
    %1622 = vmatpush1.msra.mxu0 0.0
    %1623 = vmatprep.subr.mxu0 0.0
    %1624 = vmatpush1.msra.mxu0 0.0
    %1625 = vmatprep.subr.mxu0 0.0
    %1626 = vmatpush1.msra.mxu0 0.0
    %1627 = vmatprep.subr.mxu0 0.0
    %1628 = vmatpush1.msra.mxu0 0.0
    %1629 = vmatprep.subr.mxu0 0.0
    %1630 = vmatpush1.msra.mxu0 0.0
    %1631 = vmatprep.subr.mxu0 0.0
    %1632 = vmatpush1.msra.mxu0 0.0
    %1633 = vmatprep.subr.mxu0 0.0
    %1634 = vmatpush1.msra.mxu0 0.0
    %1635 = vmatprep.subr.mxu0 0.0
    %1636 = vmatpush1.msra.mxu0 0.0
    %1637 = vmatprep.subr.mxu0 0.0
    %1638 = vmatpush1.msra.mxu0 0.0
    %1639 = vmatprep.subr.mxu0 0.0
    %1640 = vmatpush1.msra.mxu0 0.0
    %1641 = vmatprep.subr.mxu0 0.0
    %1642 = vmatpush1.msra.mxu0 0.0
    %1643 = vmatprep.subr.mxu0 0.0
    %1644 = vmatpush1.msra.mxu0 0.0
    %1645 = vmatprep.subr.mxu0 0.0
    %1646 = vmatpush1.msra.mxu0 0.0
    %1647 = vmatprep.subr.mxu0 0.0
    %1648 = vmatpush1.msra.mxu0 0.0
    %1649 = vmatprep.subr.mxu0 0.0
    %1650 = vmatpush1.msra.mxu0 0.0
    %1651 = vmatprep.subr.mxu0 0.0
    %1652 = vmatpush1.msra.mxu0 0.0
    %1653 = vmatprep.subr.mxu0 0.0
    %1654 = vmatpush1.msra.mxu0 0.0
    %1655 = vmatprep.subr.mxu0 0.0
    %1656 = vmatpush1.msra.mxu0 0.0
    %1657 = vmatprep.subr.mxu0 0.0
    %1658 = vmatpush1.msra.mxu0 0.0
    %1659 = vmatprep.mubr.f32.mxu0 0.0
    %1660 = vmatmul.mubr.f32.gmra.mrb[0].mxu0 %v303
    %v1661 = vpop.f32.mrb[0].mxu0
    %v1662 = vadd.f32 0.0, %v1661
    %v1663 = vpop.f32.mrb[0].mxu0
    %1664 = vdwg.mxu0
    %s1665 = scalar_lea.vmem %s0, 192
    %v1666 = vld [vmem:[%s1665] sm:$0xff]
    %v1667 = vld [vmem:[%s1665 + $0x8] sm:$0xff]
    %v1668 = vld [vmem:[%s1665 + $0x10] sm:$0xff]
    %v1669 = vld [vmem:[%s1665 + $0x18] sm:$0xff]
    %1670 = vmatprep.subr.mxu0 0.0
    %1671 = vmatpush1.msra.mxu0 %v1666
    %1672 = vmatprep.subr.mxu0 0.0
    %1673 = vmatpush1.msra.mxu0 %v1667
    %1674 = vmatprep.subr.mxu0 0.0
    %1675 = vmatpush1.msra.mxu0 %v1668
    %1676 = vmatprep.subr.mxu0 0.0
    %1677 = vmatpush1.msra.mxu0 %v1669
    %1678 = vmatprep.subr.mxu0 0.0
    %1679 = vmatpush1.msra.mxu0 0.0
    %1680 = vmatprep.subr.mxu0 0.0
    %1681 = vmatpush1.msra.mxu0 0.0
    %1682 = vmatprep.subr.mxu0 0.0
    %1683 = vmatpush1.msra.mxu0 0.0
    %1684 = vmatprep.subr.mxu0 0.0
    %1685 = vmatpush1.msra.mxu0 0.0
    %1686 = vmatprep.subr.mxu0 0.0
    %1687 = vmatpush1.msra.mxu0 0.0
    %1688 = vmatprep.subr.mxu0 0.0
    %1689 = vmatpush1.msra.mxu0 0.0
    %1690 = vmatprep.subr.mxu0 0.0
    %1691 = vmatpush1.msra.mxu0 0.0
    %1692 = vmatprep.subr.mxu0 0.0
    %1693 = vmatpush1.msra.mxu0 0.0
    %1694 = vmatprep.subr.mxu0 0.0
    %1695 = vmatpush1.msra.mxu0 0.0
    %1696 = vmatprep.subr.mxu0 0.0
    %1697 = vmatpush1.msra.mxu0 0.0
    %1698 = vmatprep.subr.mxu0 0.0
    %1699 = vmatpush1.msra.mxu0 0.0
    %1700 = vmatprep.subr.mxu0 0.0
    %1701 = vmatpush1.msra.mxu0 0.0
    %1702 = vmatprep.subr.mxu0 0.0
    %1703 = vmatpush1.msra.mxu0 0.0
    %1704 = vmatprep.subr.mxu0 0.0
    %1705 = vmatpush1.msra.mxu0 0.0
    %1706 = vmatprep.subr.mxu0 0.0
    %1707 = vmatpush1.msra.mxu0 0.0
    %1708 = vmatprep.subr.mxu0 0.0
    %1709 = vmatpush1.msra.mxu0 0.0
    %1710 = vmatprep.subr.mxu0 0.0
    %1711 = vmatpush1.msra.mxu0 0.0
    %1712 = vmatprep.subr.mxu0 0.0
    %1713 = vmatpush1.msra.mxu0 0.0
    %1714 = vmatprep.subr.mxu0 0.0
    %1715 = vmatpush1.msra.mxu0 0.0
    %1716 = vmatprep.subr.mxu0 0.0
    %1717 = vmatpush1.msra.mxu0 0.0
    %1718 = vmatprep.subr.mxu0 0.0
    %1719 = vmatpush1.msra.mxu0 0.0
    %1720 = vmatprep.subr.mxu0 0.0
    %1721 = vmatpush1.msra.mxu0 0.0
    %1722 = vmatprep.subr.mxu0 0.0
    %1723 = vmatpush1.msra.mxu0 0.0
    %1724 = vmatprep.subr.mxu0 0.0
    %1725 = vmatpush1.msra.mxu0 0.0
    %1726 = vmatprep.subr.mxu0 0.0
    %1727 = vmatpush1.msra.mxu0 0.0
    %1728 = vmatprep.subr.mxu0 0.0
    %1729 = vmatpush1.msra.mxu0 0.0
    %1730 = vmatprep.subr.mxu0 0.0
    %1731 = vmatpush1.msra.mxu0 0.0
    %1732 = vmatprep.subr.mxu0 0.0
    %1733 = vmatpush1.msra.mxu0 0.0
    %1734 = vmatprep.mubr.f32.mxu0 0.0
    %1735 = vmatmul.mubr.f32.gmra.mrb[0].mxu0 %v87
    %v1736 = vpop.f32.mrb[0].mxu0
    %v1737 = vadd.f32 %v48, %v1736
    %v1738 = vpop.f32.mrb[0].mxu0
    %1739 = vmatprep.mubr.f32.mxu0 0.0
    %1740 = vmatmul.mubr.f32.gmra.mrb[0].mxu0 %v90
    %v1741 = vpop.f32.mrb[0].mxu0
    %v1742 = vadd.f32 %v53, %v1741
    %v1743 = vpop.f32.mrb[0].mxu0
    %1744 = vmatprep.mubr.f32.mxu0 0.0
    %1745 = vmatmul.mubr.f32.gmra.mrb[0].mxu0 %v93
    %v1746 = vpop.f32.mrb[0].mxu0
    %v1747 = vadd.f32 %v58, %v1746
    %v1748 = vpop.f32.mrb[0].mxu0
    %1749 = vmatprep.mubr.f32.mxu0 0.0
    %1750 = vmatmul.mubr.f32.gmra.mrb[0].mxu0 %v96
    %v1751 = vpop.f32.mrb[0].mxu0
    %v1752 = vadd.f32 %v63, %v1751
    %v1753 = vpop.f32.mrb[0].mxu0
    %1754 = vmatprep.mubr.f32.mxu0 0.0
    %1755 = vmatmul.mubr.f32.gmra.mrb[0].mxu0 %v99
    %v1756 = vpop.f32.mrb[0].mxu0
    %v1757 = vadd.f32 %v68, %v1756
    %v1758 = vpop.f32.mrb[0].mxu0
    %1759 = vmatprep.mubr.f32.mxu0 0.0
    %1760 = vmatmul.mubr.f32.gmra.mrb[0].mxu0 %v102
    %v1761 = vpop.f32.mrb[0].mxu0
    %v1762 = vadd.f32 %v73, %v1761
    %v1763 = vpop.f32.mrb[0].mxu0
    %1764 = vmatprep.mubr.f32.mxu0 0.0
    %1765 = vmatmul.mubr.f32.gmra.mrb[0].mxu0 %v105
    %v1766 = vpop.f32.mrb[0].mxu0
    %v1767 = vadd.f32 %v78, %v1766
    %v1768 = vpop.f32.mrb[0].mxu0
    %1769 = vmatprep.mubr.f32.mxu0 0.0
    %1770 = vmatmul.mubr.f32.gmra.mrb[0].mxu0 %v108
    %v1771 = vpop.f32.mrb[0].mxu0
    %v1772 = vadd.f32 %v83, %v1771
    %v1773 = vpop.f32.mrb[0].mxu0
    %1774 = vdwg.mxu0
    %v1775 = vtanh.pop %v1737
    %v1776 = vtanh.pop %v1742
    %v1777 = vtanh.pop %v1747
    %v1778 = vtanh.pop %v1752
    %v1779 = vtanh.pop %v1757
    %v1780 = vtanh.pop %v1762
    %v1781 = vtanh.pop %v1767
    %v1782 = vtanh.pop %v1772
    %1783 = vmatprep.subr.mxu0 0.0
    %1784 = vmatpush1.msra.mxu0 %v1775
    %1785 = vmatprep.subr.mxu0 0.0
    %1786 = vmatpush1.msra.mxu0 %v1776
    %1787 = vmatprep.subr.mxu0 0.0
    %1788 = vmatpush1.msra.mxu0 %v1777
    %1789 = vmatprep.subr.mxu0 0.0
    %1790 = vmatpush1.msra.mxu0 %v1778
    %1791 = vmatprep.subr.mxu0 0.0
    %1792 = vmatpush1.msra.mxu0 %v1779
    %1793 = vmatprep.subr.mxu0 0.0
    %1794 = vmatpush1.msra.mxu0 %v1780
    %1795 = vmatprep.subr.mxu0 0.0
    %1796 = vmatpush1.msra.mxu0 %v1781
    %1797 = vmatprep.subr.mxu0 0.0
    %1798 = vmatpush1.msra.mxu0 %v1782
    %1799 = vmatprep.subr.mxu0 0.0
    %1800 = vmatpush1.msra.mxu0 0.0
    %1801 = vmatprep.subr.mxu0 0.0
    %1802 = vmatpush1.msra.mxu0 0.0
    %1803 = vmatprep.subr.mxu0 0.0
    %1804 = vmatpush1.msra.mxu0 0.0
    %1805 = vmatprep.subr.mxu0 0.0
    %1806 = vmatpush1.msra.mxu0 0.0
    %1807 = vmatprep.subr.mxu0 0.0
    %1808 = vmatpush1.msra.mxu0 0.0
    %1809 = vmatprep.subr.mxu0 0.0
    %1810 = vmatpush1.msra.mxu0 0.0
    %1811 = vmatprep.subr.mxu0 0.0
    %1812 = vmatpush1.msra.mxu0 0.0
    %1813 = vmatprep.subr.mxu0 0.0
    %1814 = vmatpush1.msra.mxu0 0.0
    %1815 = vmatprep.subr.mxu0 0.0
    %1816 = vmatpush1.msra.mxu0 0.0
    %1817 = vmatprep.subr.mxu0 0.0
    %1818 = vmatpush1.msra.mxu0 0.0
    %1819 = vmatprep.subr.mxu0 0.0
    %1820 = vmatpush1.msra.mxu0 0.0
    %1821 = vmatprep.subr.mxu0 0.0
    %1822 = vmatpush1.msra.mxu0 0.0
    %1823 = vmatprep.subr.mxu0 0.0
    %1824 = vmatpush1.msra.mxu0 0.0
    %1825 = vmatprep.subr.mxu0 0.0
    %1826 = vmatpush1.msra.mxu0 0.0
    %1827 = vmatprep.subr.mxu0 0.0
    %1828 = vmatpush1.msra.mxu0 0.0
    %1829 = vmatprep.subr.mxu0 0.0
    %1830 = vmatpush1.msra.mxu0 0.0
    %1831 = vmatprep.subr.mxu0 0.0
    %1832 = vmatpush1.msra.mxu0 0.0
    %1833 = vmatprep.subr.mxu0 0.0
    %1834 = vmatpush1.msra.mxu0 0.0
    %1835 = vmatprep.subr.mxu0 0.0
    %1836 = vmatpush1.msra.mxu0 0.0
    %1837 = vmatprep.subr.mxu0 0.0
    %1838 = vmatpush1.msra.mxu0 0.0
    %1839 = vmatprep.subr.mxu0 0.0
    %1840 = vmatpush1.msra.mxu0 0.0
    %1841 = vmatprep.subr.mxu0 0.0
    %1842 = vmatpush1.msra.mxu0 0.0
    %1843 = vmatprep.subr.mxu0 0.0
    %1844 = vmatpush1.msra.mxu0 0.0
    %1845 = vmatprep.subr.mxu0 0.0
    %1846 = vmatpush1.msra.mxu0 0.0
    %1847 = vmatprep.mubr.f32.mxu0 0.0
    %1848 = vmatmul.mubr.f32.gmra.mrb[0].mxu0 %v230
    %v1849 = vpop.f32.mrb[0].mxu0
    %v1850 = vadd.f32 %v226, %v1849
    %v1851 = vpop.f32.mrb[0].mxu0
    %1852 = vdwg.mxu0
    %1853 = vmatprep.subr.mxu0 0.0
    %1854 = vmatpush1.msra.mxu0 %v1666
    %1855 = vmatprep.subr.mxu0 0.0
    %1856 = vmatpush1.msra.mxu0 %v1667
    %1857 = vmatprep.subr.mxu0 0.0
    %1858 = vmatpush1.msra.mxu0 %v1668
    %1859 = vmatprep.subr.mxu0 0.0
    %1860 = vmatpush1.msra.mxu0 %v1669
    %1861 = vmatprep.subr.mxu0 0.0
    %1862 = vmatpush1.msra.mxu0 0.0
    %1863 = vmatprep.subr.mxu0 0.0
    %1864 = vmatpush1.msra.mxu0 0.0
    %1865 = vmatprep.subr.mxu0 0.0
    %1866 = vmatpush1.msra.mxu0 0.0
    %1867 = vmatprep.subr.mxu0 0.0
    %1868 = vmatpush1.msra.mxu0 0.0
    %1869 = vmatprep.subr.mxu0 0.0
    %1870 = vmatpush1.msra.mxu0 0.0
    %1871 = vmatprep.subr.mxu0 0.0
    %1872 = vmatpush1.msra.mxu0 0.0
    %1873 = vmatprep.subr.mxu0 0.0
    %1874 = vmatpush1.msra.mxu0 0.0
    %1875 = vmatprep.subr.mxu0 0.0
    %1876 = vmatpush1.msra.mxu0 0.0
    %1877 = vmatprep.subr.mxu0 0.0
    %1878 = vmatpush1.msra.mxu0 0.0
    %1879 = vmatprep.subr.mxu0 0.0
    %1880 = vmatpush1.msra.mxu0 0.0
    %1881 = vmatprep.subr.mxu0 0.0
    %1882 = vmatpush1.msra.mxu0 0.0
    %1883 = vmatprep.subr.mxu0 0.0
    %1884 = vmatpush1.msra.mxu0 0.0
    %1885 = vmatprep.subr.mxu0 0.0
    %1886 = vmatpush1.msra.mxu0 0.0
    %1887 = vmatprep.subr.mxu0 0.0
    %1888 = vmatpush1.msra.mxu0 0.0
    %1889 = vmatprep.subr.mxu0 0.0
    %1890 = vmatpush1.msra.mxu0 0.0
    %1891 = vmatprep.subr.mxu0 0.0
    %1892 = vmatpush1.msra.mxu0 0.0
    %1893 = vmatprep.subr.mxu0 0.0
    %1894 = vmatpush1.msra.mxu0 0.0
    %1895 = vmatprep.subr.mxu0 0.0
    %1896 = vmatpush1.msra.mxu0 0.0
    %1897 = vmatprep.subr.mxu0 0.0
    %1898 = vmatpush1.msra.mxu0 0.0
    %1899 = vmatprep.subr.mxu0 0.0
    %1900 = vmatpush1.msra.mxu0 0.0
    %1901 = vmatprep.subr.mxu0 0.0
    %1902 = vmatpush1.msra.mxu0 0.0
    %1903 = vmatprep.subr.mxu0 0.0
    %1904 = vmatpush1.msra.mxu0 0.0
    %1905 = vmatprep.subr.mxu0 0.0
    %1906 = vmatpush1.msra.mxu0 0.0
    %1907 = vmatprep.subr.mxu0 0.0
    %1908 = vmatpush1.msra.mxu0 0.0
    %1909 = vmatprep.subr.mxu0 0.0
    %1910 = vmatpush1.msra.mxu0 0.0
    %1911 = vmatprep.subr.mxu0 0.0
    %1912 = vmatpush1.msra.mxu0 0.0
    %1913 = vmatprep.subr.mxu0 0.0
    %1914 = vmatpush1.msra.mxu0 0.0
    %1915 = vmatprep.subr.mxu0 0.0
    %1916 = vmatpush1.msra.mxu0 0.0
    %1917 = vmatprep.mubr.f32.mxu0 0.0
    %1918 = vmatmul.mubr.f32.gmra.mrb[0].mxu0 %v303
    %v1919 = vpop.f32.mrb[0].mxu0
    %v1920 = vadd.f32 0.0, %v1919
    %v1921 = vpop.f32.mrb[0].mxu0
    %1922 = vdwg.mxu0
    %s1923 = scalar_lea.vmem %s0, 224
    %v1924 = vld [vmem:[%s1923] sm:$0xff]
    %v1925 = vld [vmem:[%s1923 + $0x8] sm:$0xff]
    %v1926 = vld [vmem:[%s1923 + $0x10] sm:$0xff]
    %v1927 = vld [vmem:[%s1923 + $0x18] sm:$0xff]
    %1928 = vmatprep.subr.mxu0 0.0
    %1929 = vmatpush1.msra.mxu0 %v1924
    %1930 = vmatprep.subr.mxu0 0.0
    %1931 = vmatpush1.msra.mxu0 %v1925
    %1932 = vmatprep.subr.mxu0 0.0
    %1933 = vmatpush1.msra.mxu0 %v1926
    %1934 = vmatprep.subr.mxu0 0.0
    %1935 = vmatpush1.msra.mxu0 %v1927
    %1936 = vmatprep.subr.mxu0 0.0
    %1937 = vmatpush1.msra.mxu0 0.0
    %1938 = vmatprep.subr.mxu0 0.0
    %1939 = vmatpush1.msra.mxu0 0.0
    %1940 = vmatprep.subr.mxu0 0.0
    %1941 = vmatpush1.msra.mxu0 0.0
    %1942 = vmatprep.subr.mxu0 0.0
    %1943 = vmatpush1.msra.mxu0 0.0
    %1944 = vmatprep.subr.mxu0 0.0
    %1945 = vmatpush1.msra.mxu0 0.0
    %1946 = vmatprep.subr.mxu0 0.0
    %1947 = vmatpush1.msra.mxu0 0.0
    %1948 = vmatprep.subr.mxu0 0.0
    %1949 = vmatpush1.msra.mxu0 0.0
    %1950 = vmatprep.subr.mxu0 0.0
    %1951 = vmatpush1.msra.mxu0 0.0
    %1952 = vmatprep.subr.mxu0 0.0
    %1953 = vmatpush1.msra.mxu0 0.0
    %1954 = vmatprep.subr.mxu0 0.0
    %1955 = vmatpush1.msra.mxu0 0.0
    %1956 = vmatprep.subr.mxu0 0.0
    %1957 = vmatpush1.msra.mxu0 0.0
    %1958 = vmatprep.subr.mxu0 0.0
    %1959 = vmatpush1.msra.mxu0 0.0
    %1960 = vmatprep.subr.mxu0 0.0
    %1961 = vmatpush1.msra.mxu0 0.0
    %1962 = vmatprep.subr.mxu0 0.0
    %1963 = vmatpush1.msra.mxu0 0.0
    %1964 = vmatprep.subr.mxu0 0.0
    %1965 = vmatpush1.msra.mxu0 0.0
    %1966 = vmatprep.subr.mxu0 0.0
    %1967 = vmatpush1.msra.mxu0 0.0
    %1968 = vmatprep.subr.mxu0 0.0
    %1969 = vmatpush1.msra.mxu0 0.0
    %1970 = vmatprep.subr.mxu0 0.0
    %1971 = vmatpush1.msra.mxu0 0.0
    %1972 = vmatprep.subr.mxu0 0.0
    %1973 = vmatpush1.msra.mxu0 0.0
    %1974 = vmatprep.subr.mxu0 0.0
    %1975 = vmatpush1.msra.mxu0 0.0
    %1976 = vmatprep.subr.mxu0 0.0
    %1977 = vmatpush1.msra.mxu0 0.0
    %1978 = vmatprep.subr.mxu0 0.0
    %1979 = vmatpush1.msra.mxu0 0.0
    %1980 = vmatprep.subr.mxu0 0.0
    %1981 = vmatpush1.msra.mxu0 0.0
    %1982 = vmatprep.subr.mxu0 0.0
    %1983 = vmatpush1.msra.mxu0 0.0
    %1984 = vmatprep.subr.mxu0 0.0
    %1985 = vmatpush1.msra.mxu0 0.0
    %1986 = vmatprep.subr.mxu0 0.0
    %1987 = vmatpush1.msra.mxu0 0.0
    %1988 = vmatprep.subr.mxu0 0.0
    %1989 = vmatpush1.msra.mxu0 0.0
    %1990 = vmatprep.subr.mxu0 0.0
    %1991 = vmatpush1.msra.mxu0 0.0
    %1992 = vmatprep.mubr.f32.mxu0 0.0
    %1993 = vmatmul.mubr.f32.gmra.mrb[0].mxu0 %v87
    %v1994 = vpop.f32.mrb[0].mxu0
    %v1995 = vadd.f32 %v48, %v1994
    %v1996 = vpop.f32.mrb[0].mxu0
    %1997 = vmatprep.mubr.f32.mxu0 0.0
    %1998 = vmatmul.mubr.f32.gmra.mrb[0].mxu0 %v90
    %v1999 = vpop.f32.mrb[0].mxu0
    %v2000 = vadd.f32 %v53, %v1999
    %v2001 = vpop.f32.mrb[0].mxu0
    %2002 = vmatprep.mubr.f32.mxu0 0.0
    %2003 = vmatmul.mubr.f32.gmra.mrb[0].mxu0 %v93
    %v2004 = vpop.f32.mrb[0].mxu0
    %v2005 = vadd.f32 %v58, %v2004
    %v2006 = vpop.f32.mrb[0].mxu0
    %2007 = vmatprep.mubr.f32.mxu0 0.0
    %2008 = vmatmul.mubr.f32.gmra.mrb[0].mxu0 %v96
    %v2009 = vpop.f32.mrb[0].mxu0
    %v2010 = vadd.f32 %v63, %v2009
    %v2011 = vpop.f32.mrb[0].mxu0
    %2012 = vmatprep.mubr.f32.mxu0 0.0
    %2013 = vmatmul.mubr.f32.gmra.mrb[0].mxu0 %v99
    %v2014 = vpop.f32.mrb[0].mxu0
    %v2015 = vadd.f32 %v68, %v2014
    %v2016 = vpop.f32.mrb[0].mxu0
    %2017 = vmatprep.mubr.f32.mxu0 0.0
    %2018 = vmatmul.mubr.f32.gmra.mrb[0].mxu0 %v102
    %v2019 = vpop.f32.mrb[0].mxu0
    %v2020 = vadd.f32 %v73, %v2019
    %v2021 = vpop.f32.mrb[0].mxu0
    %2022 = vmatprep.mubr.f32.mxu0 0.0
    %2023 = vmatmul.mubr.f32.gmra.mrb[0].mxu0 %v105
    %v2024 = vpop.f32.mrb[0].mxu0
    %v2025 = vadd.f32 %v78, %v2024
    %v2026 = vpop.f32.mrb[0].mxu0
    %2027 = vmatprep.mubr.f32.mxu0 0.0
    %2028 = vmatmul.mubr.f32.gmra.mrb[0].mxu0 %v108
    %v2029 = vpop.f32.mrb[0].mxu0
    %v2030 = vadd.f32 %v83, %v2029
    %v2031 = vpop.f32.mrb[0].mxu0
    %2032 = vdwg.mxu0
    %v2033 = vtanh.pop %v1995
    %v2034 = vtanh.pop %v2000
    %v2035 = vtanh.pop %v2005
    %v2036 = vtanh.pop %v2010
    %v2037 = vtanh.pop %v2015
    %v2038 = vtanh.pop %v2020
    %v2039 = vtanh.pop %v2025
    %v2040 = vtanh.pop %v2030
    %2041 = vmatprep.subr.mxu0 0.0
    %2042 = vmatpush1.msra.mxu0 %v2033
    %2043 = vmatprep.subr.mxu0 0.0
    %2044 = vmatpush1.msra.mxu0 %v2034
    %2045 = vmatprep.subr.mxu0 0.0
    %2046 = vmatpush1.msra.mxu0 %v2035
    %2047 = vmatprep.subr.mxu0 0.0
    %2048 = vmatpush1.msra.mxu0 %v2036
    %2049 = vmatprep.subr.mxu0 0.0
    %2050 = vmatpush1.msra.mxu0 %v2037
    %2051 = vmatprep.subr.mxu0 0.0
    %2052 = vmatpush1.msra.mxu0 %v2038
    %2053 = vmatprep.subr.mxu0 0.0
    %2054 = vmatpush1.msra.mxu0 %v2039
    %2055 = vmatprep.subr.mxu0 0.0
    %2056 = vmatpush1.msra.mxu0 %v2040
    %2057 = vmatprep.subr.mxu0 0.0
    %2058 = vmatpush1.msra.mxu0 0.0
    %2059 = vmatprep.subr.mxu0 0.0
    %2060 = vmatpush1.msra.mxu0 0.0
    %2061 = vmatprep.subr.mxu0 0.0
    %2062 = vmatpush1.msra.mxu0 0.0
    %2063 = vmatprep.subr.mxu0 0.0
    %2064 = vmatpush1.msra.mxu0 0.0
    %2065 = vmatprep.subr.mxu0 0.0
    %2066 = vmatpush1.msra.mxu0 0.0
    %2067 = vmatprep.subr.mxu0 0.0
    %2068 = vmatpush1.msra.mxu0 0.0
    %2069 = vmatprep.subr.mxu0 0.0
    %2070 = vmatpush1.msra.mxu0 0.0
    %2071 = vmatprep.subr.mxu0 0.0
    %2072 = vmatpush1.msra.mxu0 0.0
    %2073 = vmatprep.subr.mxu0 0.0
    %2074 = vmatpush1.msra.mxu0 0.0
    %2075 = vmatprep.subr.mxu0 0.0
    %2076 = vmatpush1.msra.mxu0 0.0
    %2077 = vmatprep.subr.mxu0 0.0
    %2078 = vmatpush1.msra.mxu0 0.0
    %2079 = vmatprep.subr.mxu0 0.0
    %2080 = vmatpush1.msra.mxu0 0.0
    %2081 = vmatprep.subr.mxu0 0.0
    %2082 = vmatpush1.msra.mxu0 0.0
    %2083 = vmatprep.subr.mxu0 0.0
    %2084 = vmatpush1.msra.mxu0 0.0
    %2085 = vmatprep.subr.mxu0 0.0
    %2086 = vmatpush1.msra.mxu0 0.0
    %2087 = vmatprep.subr.mxu0 0.0
    %2088 = vmatpush1.msra.mxu0 0.0
    %2089 = vmatprep.subr.mxu0 0.0
    %2090 = vmatpush1.msra.mxu0 0.0
    %2091 = vmatprep.subr.mxu0 0.0
    %2092 = vmatpush1.msra.mxu0 0.0
    %2093 = vmatprep.subr.mxu0 0.0
    %2094 = vmatpush1.msra.mxu0 0.0
    %2095 = vmatprep.subr.mxu0 0.0
    %2096 = vmatpush1.msra.mxu0 0.0
    %2097 = vmatprep.subr.mxu0 0.0
    %2098 = vmatpush1.msra.mxu0 0.0
    %2099 = vmatprep.subr.mxu0 0.0
    %2100 = vmatpush1.msra.mxu0 0.0
    %2101 = vmatprep.subr.mxu0 0.0
    %2102 = vmatpush1.msra.mxu0 0.0
    %2103 = vmatprep.subr.mxu0 0.0
    %2104 = vmatpush1.msra.mxu0 0.0
    %2105 = vmatprep.mubr.f32.mxu0 0.0
    %2106 = vmatmul.mubr.f32.gmra.mrb[0].mxu0 %v230
    %v2107 = vpop.f32.mrb[0].mxu0
    %v2108 = vadd.f32 %v226, %v2107
    %v2109 = vpop.f32.mrb[0].mxu0
    %2110 = vdwg.mxu0
    %2111 = vmatprep.subr.mxu0 0.0
    %2112 = vmatpush1.msra.mxu0 %v1924
    %2113 = vmatprep.subr.mxu0 0.0
    %2114 = vmatpush1.msra.mxu0 %v1925
    %2115 = vmatprep.subr.mxu0 0.0
    %2116 = vmatpush1.msra.mxu0 %v1926
    %2117 = vmatprep.subr.mxu0 0.0
    %2118 = vmatpush1.msra.mxu0 %v1927
    %2119 = vmatprep.subr.mxu0 0.0
    %2120 = vmatpush1.msra.mxu0 0.0
    %2121 = vmatprep.subr.mxu0 0.0
    %2122 = vmatpush1.msra.mxu0 0.0
    %2123 = vmatprep.subr.mxu0 0.0
    %2124 = vmatpush1.msra.mxu0 0.0
    %2125 = vmatprep.subr.mxu0 0.0
    %2126 = vmatpush1.msra.mxu0 0.0
    %2127 = vmatprep.subr.mxu0 0.0
    %2128 = vmatpush1.msra.mxu0 0.0
    %2129 = vmatprep.subr.mxu0 0.0
    %2130 = vmatpush1.msra.mxu0 0.0
    %2131 = vmatprep.subr.mxu0 0.0
    %2132 = vmatpush1.msra.mxu0 0.0
    %2133 = vmatprep.subr.mxu0 0.0
    %2134 = vmatpush1.msra.mxu0 0.0
    %2135 = vmatprep.subr.mxu0 0.0
    %2136 = vmatpush1.msra.mxu0 0.0
    %2137 = vmatprep.subr.mxu0 0.0
    %2138 = vmatpush1.msra.mxu0 0.0
    %2139 = vmatprep.subr.mxu0 0.0
    %2140 = vmatpush1.msra.mxu0 0.0
    %2141 = vmatprep.subr.mxu0 0.0
    %2142 = vmatpush1.msra.mxu0 0.0
    %2143 = vmatprep.subr.mxu0 0.0
    %2144 = vmatpush1.msra.mxu0 0.0
    %2145 = vmatprep.subr.mxu0 0.0
    %2146 = vmatpush1.msra.mxu0 0.0
    %2147 = vmatprep.subr.mxu0 0.0
    %2148 = vmatpush1.msra.mxu0 0.0
    %2149 = vmatprep.subr.mxu0 0.0
    %2150 = vmatpush1.msra.mxu0 0.0
    %2151 = vmatprep.subr.mxu0 0.0
    %2152 = vmatpush1.msra.mxu0 0.0
    %2153 = vmatprep.subr.mxu0 0.0
    %2154 = vmatpush1.msra.mxu0 0.0
    %2155 = vmatprep.subr.mxu0 0.0
    %2156 = vmatpush1.msra.mxu0 0.0
    %2157 = vmatprep.subr.mxu0 0.0
    %2158 = vmatpush1.msra.mxu0 0.0
    %2159 = vmatprep.subr.mxu0 0.0
    %2160 = vmatpush1.msra.mxu0 0.0
    %2161 = vmatprep.subr.mxu0 0.0
    %2162 = vmatpush1.msra.mxu0 0.0
    %2163 = vmatprep.subr.mxu0 0.0
    %2164 = vmatpush1.msra.mxu0 0.0
    %2165 = vmatprep.subr.mxu0 0.0
    %2166 = vmatpush1.msra.mxu0 0.0
    %2167 = vmatprep.subr.mxu0 0.0
    %2168 = vmatpush1.msra.mxu0 0.0
    %2169 = vmatprep.subr.mxu0 0.0
    %2170 = vmatpush1.msra.mxu0 0.0
    %2171 = vmatprep.subr.mxu0 0.0
    %2172 = vmatpush1.msra.mxu0 0.0
    %2173 = vmatprep.subr.mxu0 0.0
    %2174 = vmatpush1.msra.mxu0 0.0
    %2175 = vmatprep.mubr.f32.mxu0 0.0
    %2176 = vmatmul.mubr.f32.gmra.mrb[0].mxu0 %v303
    %v2177 = vpop.f32.mrb[0].mxu0
    %v2178 = vadd.f32 0.0, %v2177
    %v2179 = vpop.f32.mrb[0].mxu0
    %2180 = vdwg.mxu0
    %v2181 = vmax.f32 %v299, %v560
    %v2182 = vmax.f32 %v2181, %v818
    %v2183 = vmax.f32 %v2182, %v1076
    %v2184 = vmax.f32 %v2183, %v1334
    %v2185 = vmax.f32 %v2184, %v1592
    %v2186 = vmax.f32 %v2185, %v1850
    %v2187 = vmax.f32 %v2186, %v2108
    %v2188 = vsub.f32 %v299, %v2187
    %v2189 = vmul.f32 %v2188, 1.442695
    %v2190 = vpow.pop %v2189
    %v2191 = vadd.f32 %v2190, 0.0
    %v2192 = vmul.f32 %v2190, %v372
    %v2193 = vadd.f32 %v2192, 0.0
    %v2194 = vsub.f32 %v560, %v2187
    %v2195 = vmul.f32 %v2194, 1.442695
    %v2196 = vpow.pop %v2195
    %v2197 = vadd.f32 %v2191, %v2196
    %v2198 = vmul.f32 %v2196, %v630
    %v2199 = vadd.f32 %v2193, %v2198
    %v2200 = vsub.f32 %v818, %v2187
    %v2201 = vmul.f32 %v2200, 1.442695
    %v2202 = vpow.pop %v2201
    %v2203 = vadd.f32 %v2197, %v2202
    %v2204 = vmul.f32 %v2202, %v888
    %v2205 = vadd.f32 %v2199, %v2204
    %v2206 = vsub.f32 %v1076, %v2187
    %v2207 = vmul.f32 %v2206, 1.442695
    %v2208 = vpow.pop %v2207
    %v2209 = vadd.f32 %v2203, %v2208
    %v2210 = vmul.f32 %v2208, %v1146
    %v2211 = vadd.f32 %v2205, %v2210
    %v2212 = vsub.f32 %v1334, %v2187
    %v2213 = vmul.f32 %v2212, 1.442695
    %v2214 = vpow.pop %v2213
    %v2215 = vadd.f32 %v2209, %v2214
    %v2216 = vmul.f32 %v2214, %v1404
    %v2217 = vadd.f32 %v2211, %v2216
    %v2218 = vsub.f32 %v1592, %v2187
    %v2219 = vmul.f32 %v2218, 1.442695
    %v2220 = vpow.pop %v2219
    %v2221 = vadd.f32 %v2215, %v2220
    %v2222 = vmul.f32 %v2220, %v1662
    %v2223 = vadd.f32 %v2217, %v2222
    %v2224 = vsub.f32 %v1850, %v2187
    %v2225 = vmul.f32 %v2224, 1.442695
    %v2226 = vpow.pop %v2225
    %v2227 = vadd.f32 %v2221, %v2226
    %v2228 = vmul.f32 %v2226, %v1920
    %v2229 = vadd.f32 %v2223, %v2228
    %v2230 = vsub.f32 %v2108, %v2187
    %v2231 = vmul.f32 %v2230, 1.442695
    %v2232 = vpow.pop %v2231
    %v2233 = vadd.f32 %v2227, %v2232
    %v2234 = vmul.f32 %v2232, %v2178
    %v2235 = vadd.f32 %v2229, %v2234
    %v2236 = vrcp.pop %v2233
    %v2237 = vmul.f32 %v2235, %v2236
    %vm2238 = vcmask 26624
    %v2239 = vsel %vm2238, %v2237, 0.0
    %v2240 = vrot.slane %v2239, 4
    %v2241 = vadd.f32 %v2239, %v2240
    %v2242 = vrot.slane %v2241, 2
    %v2243 = vadd.f32 %v2241, %v2242
    %v2244 = vrot.slane %v2243, 1
    %v2245 = vadd.f32 %v2243, %v2244
    %2247 = vset.pattern.permute.xlu0 0
    %2248 = vperm.xlu0 %2247, %v40
    %v2249 = vpop.permute.xlu0 %2248
    %v2251 = vadd.f32 %v2245, %v2249
    %v2252 = vxor.u32 %v2251, 2147483648
    %v2253 = vmul.f32 %v2252, 1.442695
    %v2254 = vpow.pop %v2253
    %v2255 = vadd.f32 %v2254, 1.0
    %v2256 = vrcp.pop %v2255
    %v2257 = vmul.f32 1.0, %v2256
    %vm2258 = vcmask 24576
    %2259 = vst.msk [vmem:[#allocation2] sm:$0x1] %vm2258, %v2257
    // Predicated region
    $region22: #{tpu_custom_call.1} parent=1 // pred_check
      _
    $region23: #{tpu_custom_call.1} parent=1 // pred_check_branch
      %2261 = sbr.rel (0) target = $region25
    $region24: #{tpu_custom_call.1} parent=1 // pred_region
      %s2263 = ssub.s32 16, 16
      %2264 = vsyncadd [#allocation3], %s2263
      %s2266 = sshll.u32 [#allocation2], 4
      %s2267 = int_to_ptr.vmem [resolvable:$true] %s2266
      %2269 = dma.vmem_to_hbm [thread:$0]  %s2267, 16, %s5, [#allocation3]
    $region25: #{tpu_custom_call.1} parent=1 // pred_fallthru
      _
    // Predicated region
    $region26: #{tpu_custom_call.1} parent=1 // pred_check
      _
    $region27: #{tpu_custom_call.1} parent=1 // pred_check_branch
      %2271 = sbr.rel (0) target = $region29
    $region28: #{tpu_custom_call.1} parent=1 // pred_region
      %2272 = dma.done [#allocation3], 16
    $region29: #{tpu_custom_call.1} parent=1 // pred_fallthru
      _
    %2273 = vsyncpa [#allocation3], 1

</llo_original>
